<compile_context>
chip_gen: v7x
topology: tpu7x:2x2x1
jax: 0.10.0
libtpu: 0.0.40
codegen_flags: <defaults>
</compile_context>

<pallas_src>
import functools

import jax
import jax.numpy as jnp
from jax.experimental import pallas as pl
from jax.experimental.pallas import tpu as pltpu


def _rup(x, m):
    return (x + m - 1) // m * m


# --------------------------------------------------------------------------
# Tiling policy (shared by weight prep and the matmul call builder)
# --------------------------------------------------------------------------

def _largest_divisor_tile(n_units, max_units):
    """Largest d <= max_units with n_units % d == 0 (so padded dim is tiled exactly)."""
    for d in range(min(max_units, n_units), 0, -1):
        if n_units % d == 0:
            return d
    return 1


def _tile_kn(K, N):
    Kp = _rup(K, 128)
    TK = 128 * _largest_divisor_tile(Kp // 128, 8)     # TK <= 1024, Kp = rup(K,128) exactly
    Np = _rup(N, 128)
    TN = 128 * _largest_divisor_tile(Np // 128, 4)     # TN <= 512
    return TK, Kp, TN, Np


def _tile_m(M):
    Mp = _rup(M, 16)
    TM = 16 * _largest_divisor_tile(Mp // 16, 32)      # TM <= 512, multiple of 16 (bf16 tiles)
    return TM, Mp


_VMEM_LIMIT = 48 * 1024 * 1024   # safe on v7x (64 MiB physical); generous on v5e/v6e


# --------------------------------------------------------------------------
# Pallas kernels
# --------------------------------------------------------------------------

def _mm_kernel(a_ref, b_ref, c_ref, *rest, relu, res, res_relu):
    """bf16 A[TM,TK] @ bf16 B[TK,TN] -> f32 acc; epilogue on last K step:
       y = acc + bias ; [ReLU] ; [+ residual ; [ReLU]] ; store (bf16 or f32)."""
    if res:
        r_ref, o_ref, acc_ref = rest
    else:
        o_ref, acc_ref = rest

    @pl.when(pl.program_id(2) == 0)
    def _():
        acc_ref[...] = jnp.zeros_like(acc_ref)

    acc_ref[...] += jnp.dot(a_ref[...], b_ref[...],
                            preferred_element_type=jnp.float32)

    @pl.when(pl.program_id(2) == pl.num_programs(2) - 1)
    def _():
        y = acc_ref[...] + c_ref[...]
        if relu:
            y = jnp.maximum(y, 0.0)
        if res:
            y = y + r_ref[...].astype(jnp.float32)   # keep epilogue math in f32
            if res_relu:
                y = jnp.maximum(y, 0.0)
        o_ref[...] = y.astype(o_ref.dtype)


@functools.lru_cache(maxsize=None)
def _mm_call(M, K, N, relu, res, res_relu, out_f32):
    TM, Mp = _tile_m(M)
    TK, Kp, TN, Np = _tile_kn(K, N)
    out_dtype = jnp.float32 if out_f32 else jnp.bfloat16

    in_specs = [
        pl.BlockSpec((TM, TK), lambda i, j, k: (i, k)),
        pl.BlockSpec((TK, TN), lambda i, j, k: (k, j)),
        pl.BlockSpec((1, TN), lambda i, j, k: (0, j)),
    ]
    if res:
        in_specs.append(pl.BlockSpec((TM, TN), lambda i, j, k: (i, j)))

    call = pl.pallas_call(
        functools.partial(_mm_kernel, relu=relu, res=res, res_relu=res_relu),
        out_shape=jax.ShapeDtypeStruct((Mp, Np), out_dtype),
        grid_spec=pltpu.PrefetchScalarGridSpec(
            num_scalar_prefetch=0,
            grid=(Mp // TM, Np // TN, Kp // TK),
            in_specs=in_specs,
            out_specs=pl.BlockSpec((TM, TN), lambda i, j, k: (i, j)),
            scratch_shapes=[pltpu.VMEM((TM, TN), jnp.float32)],
        ),
        compiler_params=pltpu.CompilerParams(
            dimension_semantics=("parallel", "parallel", "arbitrary"),
            vmem_limit_bytes=_VMEM_LIMIT),
    )

    def run(a, b, c, r=None):
        a = a.astype(jnp.bfloat16)
        if (Mp, Kp) != (M, K):
            a = jnp.pad(a, ((0, Mp - M), (0, Kp - K)))
        args = [a, b, c]
        if res:
            rr = r.astype(jnp.bfloat16)
            if (Mp, Np) != (M, N):
                rr = jnp.pad(rr, ((0, Mp - M), (0, Np - N)))
            args.append(rr)
        out = call(*args)
        if (Mp, Np) != (M, N):
            out = out[:M, :N]
        return out

    if res:
        return jax.jit(lambda a, b, c, r: run(a, b, c, r))
    return jax.jit(lambda a, b, c: run(a, b, c))


def _mm(a, wp, relu, residual=None, res_relu=False, out_f32=False):
    M = int(a.shape[0])
    if residual is None:
        return _mm_call(M, wp["K"], wp["N"], bool(relu), False, False,
                        bool(out_f32))(a, wp["w"], wp["b"])
    return _mm_call(M, wp["K"], wp["N"], bool(relu), True, bool(res_relu),
                    bool(out_f32))(a, wp["w"], wp["b"], residual)


def _maxpool_kernel(ee_ref, eo_ref, oe_ref, oo_ref, o_ref, *, Ho, Wo):
    """3x3 / stride-2 / pad-1 max pooling from the 4 even/odd row/col phase tensors."""
    ee = ee_ref[0]          # (Ho+1, Wo+1, C)  even rows, even cols of the padded input
    eo = eo_ref[0]          # (Ho+1, Wo,   C)  even rows, odd cols
    oe = oe_ref[0]          # (Ho,   Wo+1, C)  odd rows,  even cols
    oo = oo_ref[0]          # (Ho,   Wo,   C)  odd rows,  odd cols
    r = jnp.maximum(jnp.maximum(ee[:Ho, :Wo], ee[:Ho, 1:Wo + 1]),
                    jnp.maximum(ee[1:Ho + 1, :Wo], ee[1:Ho + 1, 1:Wo + 1]))
    r = jnp.maximum(r, jnp.maximum(eo[:Ho, :], eo[1:Ho + 1, :]))
    r = jnp.maximum(r, jnp.maximum(oe[:, :Wo], oe[:, 1:Wo + 1]))
    r = jnp.maximum(r, oo)
    o_ref[0] = r.astype(o_ref.dtype)


@functools.lru_cache(maxsize=None)
def _maxpool_call(Nb, Ho, Wo, C):
    kern = functools.partial(_maxpool_kernel, Ho=Ho, Wo=Wo)
    call = pl.pallas_call(
        kern,
        out_shape=jax.ShapeDtypeStruct((Nb, Ho, Wo, C), jnp.bfloat16),
        grid_spec=pltpu.PrefetchScalarGridSpec(
            num_scalar_prefetch=0,
            grid=(Nb,),
            in_specs=[
                pl.BlockSpec((1, Ho + 1, Wo + 1, C), lambda n: (n, 0, 0, 0)),
                pl.BlockSpec((1, Ho + 1, Wo, C), lambda n: (n, 0, 0, 0)),
                pl.BlockSpec((1, Ho, Wo + 1, C), lambda n: (n, 0, 0, 0)),
                pl.BlockSpec((1, Ho, Wo, C), lambda n: (n, 0, 0, 0)),
            ],
            out_specs=pl.BlockSpec((1, Ho, Wo, C), lambda n: (n, 0, 0, 0)),
        ),
        compiler_params=pltpu.CompilerParams(
            dimension_semantics=("parallel",),
            vmem_limit_bytes=_VMEM_LIMIT),
    )
    return jax.jit(call)


# --------------------------------------------------------------------------
# Plain-JAX glue: im2col, sub-pixel transposed convs, maxpool phase split
# --------------------------------------------------------------------------

def _extract_patches(x, kh, kw, stride, pad):
    """x: (N,H,W,C) -> patches (N*Ho*Wo, kh*kw*C), K ordered as (kh, kw, C)."""
    N, H, W, C = x.shape
    xp = jnp.pad(x, ((0, 0), (pad, pad), (pad, pad), (0, 0)))
    Ho = (H + 2 * pad - kh) // stride + 1
    Wo = (W + 2 * pad - kw) // stride + 1
    cols = []
    for i in range(kh):
        for j in range(kw):
            cols.append(xp[:, i:i + (Ho - 1) * stride + 1:stride,
                           j:j + (Wo - 1) * stride + 1:stride, :])
    p = jnp.stack(cols, axis=3)                     # (N, Ho, Wo, kh*kw, C)
    return p.reshape(N * Ho * Wo, kh * kw * C), (N, Ho, Wo)


def conv_bn_act(x, cp, stride, padding, relu, residual=None, res_relu=False,
                out_f32=False):
    """Conv2d + folded BN + optional ReLU (+ optional fused residual add / ReLU)."""
    patches, (N, Ho, Wo) = _extract_patches(
        x.astype(jnp.bfloat16), cp["kh"], cp["kw"], stride, padding)
    r = None
    if residual is not None:
        r = residual.reshape(N * Ho * Wo, cp["cout"])
    y = _mm(patches, cp, relu, r, res_relu, out_f32)
    return y.reshape(N, Ho, Wo, cp["cout"])


# Sub-pixel taps for ConvTranspose2d(k=3, stride=2, padding=1, output_padding=1):
# output pixel (2i+a, 2j+b) = sum over taps (dy, dx, kh, kw): x[i+dy, j+dx] . w[:, :, kh, kw]
_PHASES_K3 = (
    ((0, 0, 1, 1),),                                              # (even, even)
    ((0, 0, 1, 2), (0, 1, 1, 0)),                                 # (even, odd)
    ((0, 0, 2, 1), (1, 0, 0, 1)),                                 # (odd, even)
    ((0, 0, 2, 2), (0, 1, 2, 0), (1, 0, 0, 2), (1, 1, 0, 0)),     # (odd, odd)
)


def tconv_s2_k3(x, tp, relu):
    """ConvTranspose2d(k=3,s=2,p=1,op=1) + folded BN + optional ReLU as 4 sub-pixel convs."""
    # TODO(synk): the 4 tiny phase matmuls could be consolidated for very small spatial sizes.
    N, H, W, C = x.shape
    cout = tp["cout"]
    xb = jnp.pad(x.astype(jnp.bfloat16), ((0, 0), (0, 1), (0, 1), (0, 0)))
    outs = []
    for taps, wp in zip(_PHASES_K3, tp["phases"]):
        a = jnp.concatenate(
            [xb[:, dy:dy + H, dx:dx + W, :] for (dy, dx, _, _) in taps],
            axis=-1).reshape(N * H * W, len(taps) * C)
        outs.append(_mm(a, wp, relu).reshape(N, H, W, cout))
    p00, p01, p10, p11 = outs
    row0 = jnp.stack([p00, p01], axis=3)            # (N,H,W,2,C)
    row1 = jnp.stack([p10, p11], axis=3)
    y = jnp.stack([row0, row1], axis=2)             # (N,H,2,W,2,C)
    return y.reshape(N, 2 * H, 2 * W, cout)


def tconv_s2_k2(x, tp, relu, out_f32=False):
    """ConvTranspose2d(k=2,s=2,p=0) (+bias): single matmul producing all 4 sub-pixels."""
    N, H, W, C = x.shape
    cout = tp["cout"]
    a = x.astype(jnp.bfloat16).reshape(N * H * W, C)
    y = _mm(a, tp, relu, out_f32=out_f32)           # (M, 4*cout)
    y = y.reshape(N, H, W, 2, 2, cout).transpose(0, 1, 3, 2, 4, 5)
    return y.reshape(N, 2 * H, 2 * W, cout)


def maxpool_3x3_s2_p1(x):
    """nn.MaxPool2d(3, stride=2, padding=1) via 4 even/odd phase views + in-kernel max."""
    N, H, W, C = x.shape
    x = x.astype(jnp.float32)
    xp = jnp.pad(x, ((0, 0), (1, 1), (1, 1), (0, 0)), constant_values=-jnp.inf)
    Ho = (H + 2 - 3) // 2 + 1
    Wo = (W + 2 - 3) // 2 + 1
    ee = xp[:, 0:2 * Ho + 1:2, 0:2 * Wo + 1:2, :]   # (N, Ho+1, Wo+1, C)
    eo = xp[:, 0:2 * Ho + 1:2, 1:2 * Wo:2, :]       # (N, Ho+1, Wo,   C)
    oe = xp[:, 1:2 * Ho:2, 0:2 * Wo + 1:2, :]       # (N, Ho,   Wo+1, C)
    oo = xp[:, 1:2 * Ho:2, 1:2 * Wo:2, :]           # (N, Ho,   Wo,   C)
    return _maxpool_call(int(N), int(Ho), int(Wo), int(C))(ee, eo, oe, oo)


# --------------------------------------------------------------------------
# Network assembly (ResNet34 encoder + LinkNet decoders)
# --------------------------------------------------------------------------

def basic_block(x, bp):
    out = conv_bn_act(x, bp["conv1"], stride=bp["stride"], padding=1, relu=True)
    if "down" in bp:
        identity = conv_bn_act(x, bp["down"], stride=bp["stride"], padding=0, relu=False)
    else:
        identity = x
    # conv2 + BN, then residual add, then ReLU -- all fused into one matmul epilogue.
    return conv_bn_act(out, bp["conv2"], stride=1, padding=1, relu=False,
                       residual=identity, res_relu=True)


def run_layer(x, blocks):
    for bp in blocks:
        x = basic_block(x, bp)
    return x


def run_decoder(x, dp, skip):
    x = conv_bn_act(x, dp["conv1"], stride=1, padding=0, relu=True)
    if dp["stride"] == 2:
        x = tconv_s2_k3(x, dp["tp"], relu=True)
    else:  # stride-1 transposed conv == conv with flipped kernel, padding 1
        x = conv_bn_act(x, dp["tp"], stride=1, padding=1, relu=True)
    # decoder conv2 (ReLU) + skip-connection add fused into the matmul epilogue.
    return conv_bn_act(x, dp["conv2"], stride=1, padding=0, relu=True,
                       residual=skip, res_relu=False)


def link_resnet_forward(x_nchw, P):
    x = jnp.transpose(x_nchw, (0, 2, 3, 1)).astype(jnp.bfloat16)   # NCHW -> NHWC, bf16 activations

    x = conv_bn_act(x, P["in_conv"], stride=2, padding=3, relu=True, out_f32=True)
    x = maxpool_3x3_s2_p1(x)                                       # f32 in, bf16 out

    e1 = run_layer(x, P["layer1"])
    e2 = run_layer(e1, P["layer2"])
    e3 = run_layer(e2, P["layer3"])
    e4 = run_layer(e3, P["layer4"])

    d4 = run_decoder(e4, P["decoder4"], e3)
    d3 = run_decoder(d4, P["decoder3"], e2)
    d2 = run_decoder(d3, P["decoder2"], e1)
    d1 = run_decoder(d2, P["decoder1"], x)

    y = tconv_s2_k3(d1, P["tp_conv1"], relu=True)
    y = conv_bn_act(y, P["conv2"], stride=1, padding=1, relu=True)
    y = tconv_s2_k2(y, P["tp_conv2"], relu=False, out_f32=True)

    return jnp.transpose(y, (0, 3, 1, 2))                          # NHWC -> NCHW, f32


# --------------------------------------------------------------------------
# Parameter preparation: fold BN scale into weight columns, bf16 cast, pre-pad
# --------------------------------------------------------------------------

def _prep_mm_weights(w_col, s, b):
    K, N = int(w_col.shape[0]), int(w_col.shape[1])
    _, Kp, _, Np = _tile_kn(K, N)
    wc = (w_col * s[None, :]).astype(jnp.bfloat16)
    wc = jnp.pad(wc, ((0, Kp - K), (0, Np - N)))
    bb = jnp.pad(b.astype(jnp.float32).reshape(1, N), ((0, 0), (0, Np - N)))
    return {"w": wc, "b": bb, "K": K, "N": N}


def _prep_conv(p):
    w = p["w"]                                      # (cout, cin, kh, kw)
    cout, cin, kh, kw = map(int, w.shape)
    w_col = jnp.transpose(w, (2, 3, 1, 0)).reshape(kh * kw * cin, cout)
    d = _prep_mm_weights(w_col, p["s"], p["b"])
    d.update({"kh": kh, "kw": kw, "cin": cin, "cout": cout})
    return d


def _prep_tconv_s1(p):
    w = p["w"]                                      # (cin, cout, kh, kw)
    cin, cout, kh, kw = map(int, w.shape)
    w_col = jnp.flip(w, axis=(2, 3)).transpose(2, 3, 0, 1).reshape(kh * kw * cin, cout)
    d = _prep_mm_weights(w_col, p["s"], p["b"])
    d.update({"kh": kh, "kw": kw, "cin": cin, "cout": cout})
    return d


def _prep_tconv_s2_k3(p):
    w = p["w"]                                      # (cin, cout, 3, 3)
    cin, cout = int(w.shape[0]), int(w.shape[1])
    phases = []
    for taps in _PHASES_K3:
        w_col = jnp.concatenate([w[:, :, ki, kj] for (_, _, ki, kj) in taps], axis=0)
        phases.append(_prep_mm_weights(w_col, p["s"], p["b"]))
    return {"phases": phases, "cin": cin, "cout": cout}


def _prep_tconv_s2_k2(p):
    w = p["w"]                                      # (cin, cout, 2, 2)
    cin, cout = int(w.shape[0]), int(w.shape[1])
    w_col = jnp.concatenate([w[:, :, a, b] for a in (0, 1) for b in (0, 1)], axis=1)
    d = _prep_mm_weights(w_col, jnp.tile(p["s"], 4), jnp.tile(p["b"], 4))
    d.update({"cin": cin, "cout": cout})
    return d


def prepare_params(R):
    def prep_layer(blocks, first_stride):
        out = []
        for i, b in enumerate(blocks):
            d = {"conv1": _prep_conv(b["conv1"]),
                 "conv2": _prep_conv(b["conv2"]),
                 "stride": first_stride if i == 0 else 1}
            if "down" in b:
                d["down"] = _prep_conv(b["down"])
            out.append(d)
        return out

    def prep_decoder(d, stride):
        return {"conv1": _prep_conv(d["conv1"]),
                "conv2": _prep_conv(d["conv2"]),
                "tp": _prep_tconv_s2_k3(d["tp"]) if stride == 2 else _prep_tconv_s1(d["tp"]),
                "stride": stride}

    return {
        "in_conv": _prep_conv(R["in_conv"]),
        "layer1": prep_layer(R["layer1"], 1),
        "layer2": prep_layer(R["layer2"], 2),
        "layer3": prep_layer(R["layer3"], 2),
        "layer4": prep_layer(R["layer4"], 2),
        "decoder4": prep_decoder(R["decoder4"], 2),
        "decoder3": prep_decoder(R["decoder3"], 2),
        "decoder2": prep_decoder(R["decoder2"], 2),
        "decoder1": prep_decoder(R["decoder1"], 1),
        "tp_conv1": _prep_tconv_s2_k3(R["tp_conv1"]),
        "conv2": _prep_conv(R["conv2"]),
        "tp_conv2": _prep_tconv_s2_k2(R["tp_conv2"]),
    }


# --------------------------------------------------------------------------
# Deterministic synthetic parameters (PyTorch layouts)
# --------------------------------------------------------------------------

class ParamGen:
    def __init__(self, seed=0):
        self._key = jax.random.PRNGKey(seed)

    def normal(self, shape, std=1.0):
        self._key, k = jax.random.split(self._key)
        return std * jax.random.normal(k, shape, jnp.float32)


def make_params(n_channels=4, n_classes=5, seed=0):
    pg = ParamGen(seed)

    def folded_bn(cout):
        gamma = 1.0 + pg.normal((cout,), 0.1)
        beta = pg.normal((cout,), 0.05)
        mean = pg.normal((cout,), 0.05)
        var = 1.0 + jnp.abs(pg.normal((cout,), 0.1))
        s = gamma / jnp.sqrt(var + 1e-5)
        b = beta - mean * s
        return s, b

    def conv(cin, cout, k, bn=True):
        w = pg.normal((cout, cin, k, k), std=(2.0 / (cin * k * k)) ** 0.5)
        if bn:
            s, b = folded_bn(cout)
        else:
            s = jnp.ones((cout,), jnp.float32)
            b = pg.normal((cout,), 0.05)
        return {"w": w, "s": s, "b": b}

    def tconv(cin, cout, k, bn=True):
        w = pg.normal((cin, cout, k, k), std=(2.0 / (cin * k * k)) ** 0.5)
        if bn:
            s, b = folded_bn(cout)
        else:
            s = jnp.ones((cout,), jnp.float32)
            b = pg.normal((cout,), 0.05)
        return {"w": w, "s": s, "b": b}

    def basic_block_params(cin, cout, stride):
        p = {"conv1": conv(cin, cout, 3), "conv2": conv(cout, cout, 3)}
        if stride != 1 or cin != cout:
            p["down"] = conv(cin, cout, 1)
        return p

    def layer_params(cin, cout, nblocks, stride):
        blocks = [basic_block_params(cin, cout, stride)]
        for _ in range(nblocks - 1):
            blocks.append(basic_block_params(cout, cout, 1))
        return blocks

    def decoder_params(cin, cout, k):
        mid = cin // 4
        return {"conv1": conv(cin, mid, 1),
                "tp": tconv(mid, mid, k),
                "conv2": conv(mid, cout, 1)}

    return {
        "in_conv": conv(n_channels, 64, 7),
        "layer1": layer_params(64, 64, 3, 1),
        "layer2": layer_params(64, 128, 4, 2),
        "layer3": layer_params(128, 256, 6, 2),
        "layer4": layer_params(256, 512, 3, 2),
        "decoder4": decoder_params(512, 256, 3),
        "decoder3": decoder_params(256, 128, 3),
        "decoder2": decoder_params(128, 64, 3),
        "decoder1": decoder_params(64, 64, 3),
        "tp_conv1": tconv(64, 32, 3),
        "conv2": conv(32, 32, 3),
        "tp_conv2": tconv(32, n_classes, 2, bn=False),
    }


# --------------------------------------------------------------------------

if __name__ == "__main__":
    key = jax.random.PRNGKey(0)
    # Smallest spatial size that keeps all encoder/decoder shapes consistent (5 stride-2 stages).
    x = jax.random.normal(key, (2, 4, 32, 32), jnp.float32)

    raw = make_params(n_channels=4, n_classes=5, seed=0)
    params = prepare_params(raw)

    y = link_resnet_forward(x, params)
    y = jax.block_until_ready(y)

    assert y.shape == (2, 5, 32, 32), y.shape
    assert y.dtype == jnp.float32
    assert bool(jnp.all(jnp.isfinite(y)))
    print("KERNEL_OK")
</pallas_src>

<mosaic_0001>
module attributes {stable_mosaic.version = 11 : i64} {
  func.func @_mm_kernel(%arg0: i32, %arg1: i32, %arg2: i32, %arg3: memref<512x256xbf16, #tpu.memory_space<vmem>>, %arg4: memref<256x128xbf16, #tpu.memory_space<vmem>>, %arg5: memref<1x128xf32, #tpu.memory_space<vmem>>, %arg6: memref<512x128xf32, #tpu.memory_space<vmem>>, %arg7: memref<512x128xf32, #tpu.memory_space<vmem>>) attributes {dimension_semantics = [#tpu.dimension_semantics<parallel>, #tpu.dimension_semantics<parallel>, #tpu.dimension_semantics<arbitrary>], iteration_bounds = array<i64: 1, 1, 1>, scalar_prefetch = 0 : i64, scratch_operands = 1 : i64, tpu.core_type = #tpu.core_type<tc>, window_params = [{transform_indices = @transform_0, window_bounds = array<i64: 512, 256>}, {transform_indices = @transform_1, window_bounds = array<i64: 256, 128>}, {transform_indices = @transform_2, window_bounds = array<i64: 1, 128>}, {transform_indices = @transform_3, window_bounds = array<i64: 512, 128>}]} {
    %c0_i32 = arith.constant 0 : i32
    %0 = arith.cmpi eq, %arg2, %c0_i32 : i32
    %1 = arith.extui %0 : i1 to i32
    %c0_i32_0 = arith.constant 0 : i32
    %2 = arith.cmpi ne, %1, %c0_i32_0 : i32
    scf.if %2 {
      %cst_10 = arith.constant 0.000000e+00 : f32
      %12 = vector.broadcast %cst_10 : f32 to vector<512x128xf32>
      %c0_11 = arith.constant 0 : index
      %c0_12 = arith.constant 0 : index
      %13 = vector.load %arg7[%c0_11, %c0_12] : memref<512x128xf32, #tpu.memory_space<vmem>>, vector<512x128xf32>
      tpu.vector_store %arg7[%c0_11, %c0_12], %12 {strides = array<i32>} : memref<512x128xf32, #tpu.memory_space<vmem>>, vector<512x128xf32>,
    } else {
    }
    %c0 = arith.constant 0 : index
    %c0_1 = arith.constant 0 : index
    %3 = vector.load %arg7[%c0, %c0_1] : memref<512x128xf32, #tpu.memory_space<vmem>>, vector<512x128xf32>
    %c0_2 = arith.constant 0 : index
    %c0_3 = arith.constant 0 : index
    %4 = vector.load %arg3[%c0_2, %c0_3] : memref<512x256xbf16, #tpu.memory_space<vmem>>, vector<512x256xbf16>
    %c0_4 = arith.constant 0 : index
    %c0_5 = arith.constant 0 : index
    %5 = vector.load %arg4[%c0_4, %c0_5] : memref<256x128xbf16, #tpu.memory_space<vmem>>, vector<256x128xbf16>
    %cst = arith.constant dense<0.000000e+00> : vector<512x128xf32>
    %6 = tpu.matmul %4, %5, %cst {dimension_numbers = #tpu.dot_dimension_numbers<[1], [0], [0], [1], [0, 0, 1, 1], [], []>} : vector<512x256xbf16>, vector<256x128xbf16>, vector<512x128xf32> -> vector<512x128xf32>
    %7 = arith.addf %3, %6 : vector<512x128xf32>
    %c0_6 = arith.constant 0 : index
    %c0_7 = arith.constant 0 : index
    %8 = vector.load %arg7[%c0_6, %c0_7] : memref<512x128xf32, #tpu.memory_space<vmem>>, vector<512x128xf32>
    tpu.vector_store %arg7[%c0_6, %c0_7], %7 {strides = array<i32>} : memref<512x128xf32, #tpu.memory_space<vmem>>, vector<512x128xf32>,
    %c0_i32_8 = arith.constant 0 : i32
    %9 = arith.cmpi eq, %arg2, %c0_i32_8 : i32
    %10 = arith.extui %9 : i1 to i32
    %c0_i32_9 = arith.constant 0 : i32
    %11 = arith.cmpi ne, %10, %c0_i32_9 : i32
    scf.if %11 {
      %c0_10 = arith.constant 0 : index
      %c0_11 = arith.constant 0 : index
      %12 = vector.load %arg7[%c0_10, %c0_11] : memref<512x128xf32, #tpu.memory_space<vmem>>, vector<512x128xf32>
      %c0_12 = arith.constant 0 : index
      %c0_13 = arith.constant 0 : index
      %13 = vector.load %arg5[%c0_12, %c0_13] : memref<1x128xf32, #tpu.memory_space<vmem>>, vector<1x128xf32>
      %14 = vector.broadcast %13 : vector<1x128xf32> to vector<512x128xf32>
      %15 = arith.addf %12, %14 : vector<512x128xf32>
      %cst_14 = arith.constant 0.000000e+00 : f32
      %16 = vector.broadcast %cst_14 : f32 to vector<512x128xf32>
      %17 = arith.maximumf %15, %16 : vector<512x128xf32>
      %c0_15 = arith.constant 0 : index
      %c0_16 = arith.constant 0 : index
      %18 = vector.load %arg6[%c0_15, %c0_16] : memref<512x128xf32, #tpu.memory_space<vmem>>, vector<512x128xf32>
      tpu.vector_store %arg6[%c0_15, %c0_16], %17 {strides = array<i32>} : memref<512x128xf32, #tpu.memory_space<vmem>>, vector<512x128xf32>,
    } else {
    }
    return
  }
  func.func @transform_0(%arg0: i32, %arg1: i32, %arg2: i32) -> (i32, i32) {
    %c0_i32 = arith.constant 0 : i32
    return %arg0, %arg2 : i32, i32
  }
  func.func @transform_1(%arg0: i32, %arg1: i32, %arg2: i32) -> (i32, i32) {
    %c0_i32 = arith.constant 0 : i32
    return %arg2, %arg1 : i32, i32
  }
  func.func @transform_2(%arg0: i32, %arg1: i32, %arg2: i32) -> (i32, i32) {
    %c0_i32 = arith.constant 0 : i32
    %c0_i32_0 = arith.constant 0 : i32
    return %c0_i32, %arg1 : i32, i32
  }
  func.func @transform_3(%arg0: i32, %arg1: i32, %arg2: i32) -> (i32, i32) {
    %c0_i32 = arith.constant 0 : i32
    return %arg0, %arg1 : i32, i32
  }
}

</mosaic_0001>

<llo_original>
// kernel: _lambda_.1
$region0: #{_lambda_.1}
  #allocation0 [shape = 'u32[]', space=smem, size = 0x4, offset = 0x4, fixed_abs, tag = 'smem constant byte address 0x4 - core index']
  #allocation1 [shape = 'u32[144,128]{1,0:T(1,128)}', space=vmem, size = 0x12000, scoped, tag = 'internal scratch']
  #allocation2 [shape = 'f32[512,128]{1,0:T(8,128)}', space=vmem, size = 0x40000, scoped, tag = 'scratch operand']
  %s0 = inlined_call_operand.vmem [shape: bf16[512,256], index: 0, kind: input, shape index: {}]
  %s1 = inlined_call_operand.vmem [shape: bf16[256,128], index: 1, kind: input, shape index: {}]
  %s2 = inlined_call_operand.vmem [shape: f32[1,128], index: 2, kind: input, shape index: {}]
  %s3 = inlined_call_operand.vmem [shape: f32[512,128], index: 3, kind: output, shape index: {}]
  %s4 = sld [smem:[#allocation0]]
  $region30: #{_lambda_.1} parent=0
    _
  %s6 = ssub.s32 1, %s4
  %s7 = scalar_select 0, %s6, %s4
  // Predicated region
  $region2: #{_lambda_.1} parent=0 // pred_check
    _
  $region3: #{_lambda_.1} parent=0 // pred_check_branch
    %9 = sbr.rel (0) target = $region5
  $region4: #{_lambda_.1} parent=0 // pred_region
    _
  $region5: #{_lambda_.1} parent=0 // pred_fallthru
    _
  // Predicated region
  $region6: #{_lambda_.1} parent=0 // pred_check
    _
  $region7: #{_lambda_.1} parent=0 // pred_check_branch
    %11 = sbr.rel (0) target = $region9
  $region8: #{_lambda_.1} parent=0 // pred_region
    _
  $region9: #{_lambda_.1} parent=0 // pred_fallthru
    _
  // Predicated region
  $region10: #{_lambda_.1} parent=0 // pred_check
    _
  $region11: #{_lambda_.1} parent=0 // pred_check_branch
    %13 = sbr.rel (0) target = $region13
  $region12: #{_lambda_.1} parent=0 // pred_region
    _
  $region13: #{_lambda_.1} parent=0 // pred_fallthru
    _
  %p15 = scmp.eq.s32.totalorder 0, 0
  // Predicated region
  $region14: #{_lambda_.1} parent=0 // pred_check
    %p16 = pneg %p15
  $region15: #{_lambda_.1} parent=0 // pred_check_branch
    %18 = sbr.rel (%p16) target = $region17
  $region16: #{_lambda_.1} parent=0 // pred_region
    %19 = vst [vmem:[#allocation2] sm:$0xff] 0.0
    %20 = vst [vmem:[#allocation2 + $0x8] sm:$0xff] 0.0
    %21 = vst [vmem:[#allocation2 + $0x10] sm:$0xff] 0.0
    %22 = vst [vmem:[#allocation2 + $0x18] sm:$0xff] 0.0
    %23 = vst [vmem:[#allocation2 + $0x20] sm:$0xff] 0.0
    %24 = vst [vmem:[#allocation2 + $0x28] sm:$0xff] 0.0
    %25 = vst [vmem:[#allocation2 + $0x30] sm:$0xff] 0.0
    %26 = vst [vmem:[#allocation2 + $0x38] sm:$0xff] 0.0
    %27 = vst [vmem:[#allocation2 + $0x40] sm:$0xff] 0.0
    %28 = vst [vmem:[#allocation2 + $0x48] sm:$0xff] 0.0
    %29 = vst [vmem:[#allocation2 + $0x50] sm:$0xff] 0.0
    %30 = vst [vmem:[#allocation2 + $0x58] sm:$0xff] 0.0
    %31 = vst [vmem:[#allocation2 + $0x60] sm:$0xff] 0.0
    %32 = vst [vmem:[#allocation2 + $0x68] sm:$0xff] 0.0
    %33 = vst [vmem:[#allocation2 + $0x70] sm:$0xff] 0.0
    %34 = vst [vmem:[#allocation2 + $0x78] sm:$0xff] 0.0
    %35 = vst [vmem:[#allocation2 + $0x80] sm:$0xff] 0.0
    %36 = vst [vmem:[#allocation2 + $0x88] sm:$0xff] 0.0
    %37 = vst [vmem:[#allocation2 + $0x90] sm:$0xff] 0.0
    %38 = vst [vmem:[#allocation2 + $0x98] sm:$0xff] 0.0
    %39 = vst [vmem:[#allocation2 + $0xa0] sm:$0xff] 0.0
    %40 = vst [vmem:[#allocation2 + $0xa8] sm:$0xff] 0.0
    %41 = vst [vmem:[#allocation2 + $0xb0] sm:$0xff] 0.0
    %42 = vst [vmem:[#allocation2 + $0xb8] sm:$0xff] 0.0
    %43 = vst [vmem:[#allocation2 + $0xc0] sm:$0xff] 0.0
    %44 = vst [vmem:[#allocation2 + $0xc8] sm:$0xff] 0.0
    %45 = vst [vmem:[#allocation2 + $0xd0] sm:$0xff] 0.0
    %46 = vst [vmem:[#allocation2 + $0xd8] sm:$0xff] 0.0
    %47 = vst [vmem:[#allocation2 + $0xe0] sm:$0xff] 0.0
    %48 = vst [vmem:[#allocation2 + $0xe8] sm:$0xff] 0.0
    %49 = vst [vmem:[#allocation2 + $0xf0] sm:$0xff] 0.0
    %50 = vst [vmem:[#allocation2 + $0xf8] sm:$0xff] 0.0
    %51 = vst [vmem:[#allocation2 + $0x100] sm:$0xff] 0.0
    %52 = vst [vmem:[#allocation2 + $0x108] sm:$0xff] 0.0
    %53 = vst [vmem:[#allocation2 + $0x110] sm:$0xff] 0.0
    %54 = vst [vmem:[#allocation2 + $0x118] sm:$0xff] 0.0
    %55 = vst [vmem:[#allocation2 + $0x120] sm:$0xff] 0.0
    %56 = vst [vmem:[#allocation2 + $0x128] sm:$0xff] 0.0
    %57 = vst [vmem:[#allocation2 + $0x130] sm:$0xff] 0.0
    %58 = vst [vmem:[#allocation2 + $0x138] sm:$0xff] 0.0
    %59 = vst [vmem:[#allocation2 + $0x140] sm:$0xff] 0.0
    %60 = vst [vmem:[#allocation2 + $0x148] sm:$0xff] 0.0
    %61 = vst [vmem:[#allocation2 + $0x150] sm:$0xff] 0.0
    %62 = vst [vmem:[#allocation2 + $0x158] sm:$0xff] 0.0
    %63 = vst [vmem:[#allocation2 + $0x160] sm:$0xff] 0.0
    %64 = vst [vmem:[#allocation2 + $0x168] sm:$0xff] 0.0
    %65 = vst [vmem:[#allocation2 + $0x170] sm:$0xff] 0.0
    %66 = vst [vmem:[#allocation2 + $0x178] sm:$0xff] 0.0
    %67 = vst [vmem:[#allocation2 + $0x180] sm:$0xff] 0.0
    %68 = vst [vmem:[#allocation2 + $0x188] sm:$0xff] 0.0
    %69 = vst [vmem:[#allocation2 + $0x190] sm:$0xff] 0.0
    %70 = vst [vmem:[#allocation2 + $0x198] sm:$0xff] 0.0
    %71 = vst [vmem:[#allocation2 + $0x1a0] sm:$0xff] 0.0
    %72 = vst [vmem:[#allocation2 + $0x1a8] sm:$0xff] 0.0
    %73 = vst [vmem:[#allocation2 + $0x1b0] sm:$0xff] 0.0
    %74 = vst [vmem:[#allocation2 + $0x1b8] sm:$0xff] 0.0
    %75 = vst [vmem:[#allocation2 + $0x1c0] sm:$0xff] 0.0
    %76 = vst [vmem:[#allocation2 + $0x1c8] sm:$0xff] 0.0
    %77 = vst [vmem:[#allocation2 + $0x1d0] sm:$0xff] 0.0
    %78 = vst [vmem:[#allocation2 + $0x1d8] sm:$0xff] 0.0
    %79 = vst [vmem:[#allocation2 + $0x1e0] sm:$0xff] 0.0
    %80 = vst [vmem:[#allocation2 + $0x1e8] sm:$0xff] 0.0
    %81 = vst [vmem:[#allocation2 + $0x1f0] sm:$0xff] 0.0
    %82 = vst [vmem:[#allocation2 + $0x1f8] sm:$0xff] 0.0
  $region17: #{_lambda_.1} parent=0 // pred_fallthru
    _
  %v83 = vld [vmem:[#allocation2] sm:$0xff]
  %v84 = vld [vmem:[#allocation2 + $0x8] sm:$0xff]
  %v85 = vld [vmem:[#allocation2 + $0x10] sm:$0xff]
  %v86 = vld [vmem:[#allocation2 + $0x18] sm:$0xff]
  %v87 = vld [vmem:[#allocation2 + $0x20] sm:$0xff]
  %v88 = vld [vmem:[#allocation2 + $0x28] sm:$0xff]
  %v89 = vld [vmem:[#allocation2 + $0x30] sm:$0xff]
  %v90 = vld [vmem:[#allocation2 + $0x38] sm:$0xff]
  %v91 = vld [vmem:[#allocation2 + $0x40] sm:$0xff]
  %v92 = vld [vmem:[#allocation2 + $0x48] sm:$0xff]
  %v93 = vld [vmem:[#allocation2 + $0x50] sm:$0xff]
  %v94 = vld [vmem:[#allocation2 + $0x58] sm:$0xff]
  %v95 = vld [vmem:[#allocation2 + $0x60] sm:$0xff]
  %v96 = vld [vmem:[#allocation2 + $0x68] sm:$0xff]
  %v97 = vld [vmem:[#allocation2 + $0x70] sm:$0xff]
  %v98 = vld [vmem:[#allocation2 + $0x78] sm:$0xff]
  %v99 = vld [vmem:[#allocation2 + $0x80] sm:$0xff]
  %v100 = vld [vmem:[#allocation2 + $0x88] sm:$0xff]
  %v101 = vld [vmem:[#allocation2 + $0x90] sm:$0xff]
  %v102 = vld [vmem:[#allocation2 + $0x98] sm:$0xff]
  %v103 = vld [vmem:[#allocation2 + $0xa0] sm:$0xff]
  %v104 = vld [vmem:[#allocation2 + $0xa8] sm:$0xff]
  %v105 = vld [vmem:[#allocation2 + $0xb0] sm:$0xff]
  %v106 = vld [vmem:[#allocation2 + $0xb8] sm:$0xff]
  %v107 = vld [vmem:[#allocation2 + $0xc0] sm:$0xff]
  %v108 = vld [vmem:[#allocation2 + $0xc8] sm:$0xff]
  %v109 = vld [vmem:[#allocation2 + $0xd0] sm:$0xff]
  %v110 = vld [vmem:[#allocation2 + $0xd8] sm:$0xff]
  %v111 = vld [vmem:[#allocation2 + $0xe0] sm:$0xff]
  %v112 = vld [vmem:[#allocation2 + $0xe8] sm:$0xff]
  %v113 = vld [vmem:[#allocation2 + $0xf0] sm:$0xff]
  %v114 = vld [vmem:[#allocation2 + $0xf8] sm:$0xff]
  %v115 = vld [vmem:[#allocation2 + $0x100] sm:$0xff]
  %v116 = vld [vmem:[#allocation2 + $0x108] sm:$0xff]
  %v117 = vld [vmem:[#allocation2 + $0x110] sm:$0xff]
  %v118 = vld [vmem:[#allocation2 + $0x118] sm:$0xff]
  %v119 = vld [vmem:[#allocation2 + $0x120] sm:$0xff]
  %v120 = vld [vmem:[#allocation2 + $0x128] sm:$0xff]
  %v121 = vld [vmem:[#allocation2 + $0x130] sm:$0xff]
  %v122 = vld [vmem:[#allocation2 + $0x138] sm:$0xff]
  %v123 = vld [vmem:[#allocation2 + $0x140] sm:$0xff]
  %v124 = vld [vmem:[#allocation2 + $0x148] sm:$0xff]
  %v125 = vld [vmem:[#allocation2 + $0x150] sm:$0xff]
  %v126 = vld [vmem:[#allocation2 + $0x158] sm:$0xff]
  %v127 = vld [vmem:[#allocation2 + $0x160] sm:$0xff]
  %v128 = vld [vmem:[#allocation2 + $0x168] sm:$0xff]
  %v129 = vld [vmem:[#allocation2 + $0x170] sm:$0xff]
  %v130 = vld [vmem:[#allocation2 + $0x178] sm:$0xff]
  %v131 = vld [vmem:[#allocation2 + $0x180] sm:$0xff]
  %v132 = vld [vmem:[#allocation2 + $0x188] sm:$0xff]
  %v133 = vld [vmem:[#allocation2 + $0x190] sm:$0xff]
  %v134 = vld [vmem:[#allocation2 + $0x198] sm:$0xff]
  %v135 = vld [vmem:[#allocation2 + $0x1a0] sm:$0xff]
  %v136 = vld [vmem:[#allocation2 + $0x1a8] sm:$0xff]
  %v137 = vld [vmem:[#allocation2 + $0x1b0] sm:$0xff]
  %v138 = vld [vmem:[#allocation2 + $0x1b8] sm:$0xff]
  %v139 = vld [vmem:[#allocation2 + $0x1c0] sm:$0xff]
  %v140 = vld [vmem:[#allocation2 + $0x1c8] sm:$0xff]
  %v141 = vld [vmem:[#allocation2 + $0x1d0] sm:$0xff]
  %v142 = vld [vmem:[#allocation2 + $0x1d8] sm:$0xff]
  %v143 = vld [vmem:[#allocation2 + $0x1e0] sm:$0xff]
  %v144 = vld [vmem:[#allocation2 + $0x1e8] sm:$0xff]
  %v145 = vld [vmem:[#allocation2 + $0x1f0] sm:$0xff]
  %v146 = vld [vmem:[#allocation2 + $0x1f8] sm:$0xff]
  %v147 = vld [vmem:[%s0] sm:$0xff]
  %v148 = vld [vmem:[%s0 + $0x8] sm:$0xff]
  %v149 = vld [vmem:[%s0 + $0x10] sm:$0xff]
  %v150 = vld [vmem:[%s0 + $0x18] sm:$0xff]
  %v151 = vld [vmem:[%s0 + $0x20] sm:$0xff]
  %v152 = vld [vmem:[%s0 + $0x28] sm:$0xff]
  %v153 = vld [vmem:[%s0 + $0x30] sm:$0xff]
  %v154 = vld [vmem:[%s0 + $0x38] sm:$0xff]
  %v155 = vld [vmem:[%s0 + $0x40] sm:$0xff]
  %v156 = vld [vmem:[%s0 + $0x48] sm:$0xff]
  %v157 = vld [vmem:[%s0 + $0x50] sm:$0xff]
  %v158 = vld [vmem:[%s0 + $0x58] sm:$0xff]
  %v159 = vld [vmem:[%s0 + $0x60] sm:$0xff]
  %v160 = vld [vmem:[%s0 + $0x68] sm:$0xff]
  %v161 = vld [vmem:[%s0 + $0x70] sm:$0xff]
  %v162 = vld [vmem:[%s0 + $0x78] sm:$0xff]
  %v163 = vld [vmem:[%s0 + $0x80] sm:$0xff]
  %v164 = vld [vmem:[%s0 + $0x88] sm:$0xff]
  %v165 = vld [vmem:[%s0 + $0x90] sm:$0xff]
  %v166 = vld [vmem:[%s0 + $0x98] sm:$0xff]
  %v167 = vld [vmem:[%s0 + $0xa0] sm:$0xff]
  %v168 = vld [vmem:[%s0 + $0xa8] sm:$0xff]
  %v169 = vld [vmem:[%s0 + $0xb0] sm:$0xff]
  %v170 = vld [vmem:[%s0 + $0xb8] sm:$0xff]
  %v171 = vld [vmem:[%s0 + $0xc0] sm:$0xff]
  %v172 = vld [vmem:[%s0 + $0xc8] sm:$0xff]
  %v173 = vld [vmem:[%s0 + $0xd0] sm:$0xff]
  %v174 = vld [vmem:[%s0 + $0xd8] sm:$0xff]
  %v175 = vld [vmem:[%s0 + $0xe0] sm:$0xff]
  %v176 = vld [vmem:[%s0 + $0xe8] sm:$0xff]
  %v177 = vld [vmem:[%s0 + $0xf0] sm:$0xff]
  %v178 = vld [vmem:[%s0 + $0xf8] sm:$0xff]
  %v179 = vld [vmem:[%s0 + $0x100] sm:$0xff]
  %v180 = vld [vmem:[%s0 + $0x108] sm:$0xff]
  %v181 = vld [vmem:[%s0 + $0x110] sm:$0xff]
  %v182 = vld [vmem:[%s0 + $0x118] sm:$0xff]
  %v183 = vld [vmem:[%s0 + $0x120] sm:$0xff]
  %v184 = vld [vmem:[%s0 + $0x128] sm:$0xff]
  %v185 = vld [vmem:[%s0 + $0x130] sm:$0xff]
  %v186 = vld [vmem:[%s0 + $0x138] sm:$0xff]
  %v187 = vld [vmem:[%s0 + $0x140] sm:$0xff]
  %v188 = vld [vmem:[%s0 + $0x148] sm:$0xff]
  %v189 = vld [vmem:[%s0 + $0x150] sm:$0xff]
  %v190 = vld [vmem:[%s0 + $0x158] sm:$0xff]
  %v191 = vld [vmem:[%s0 + $0x160] sm:$0xff]
  %v192 = vld [vmem:[%s0 + $0x168] sm:$0xff]
  %v193 = vld [vmem:[%s0 + $0x170] sm:$0xff]
  %v194 = vld [vmem:[%s0 + $0x178] sm:$0xff]
  %v195 = vld [vmem:[%s0 + $0x180] sm:$0xff]
  %v196 = vld [vmem:[%s0 + $0x188] sm:$0xff]
  %v197 = vld [vmem:[%s0 + $0x190] sm:$0xff]
  %v198 = vld [vmem:[%s0 + $0x198] sm:$0xff]
  %v199 = vld [vmem:[%s0 + $0x1a0] sm:$0xff]
  %v200 = vld [vmem:[%s0 + $0x1a8] sm:$0xff]
  %v201 = vld [vmem:[%s0 + $0x1b0] sm:$0xff]
  %v202 = vld [vmem:[%s0 + $0x1b8] sm:$0xff]
  %v203 = vld [vmem:[%s0 + $0x1c0] sm:$0xff]
  %v204 = vld [vmem:[%s0 + $0x1c8] sm:$0xff]
  %v205 = vld [vmem:[%s0 + $0x1d0] sm:$0xff]
  %v206 = vld [vmem:[%s0 + $0x1d8] sm:$0xff]
  %v207 = vld [vmem:[%s0 + $0x1e0] sm:$0xff]
  %v208 = vld [vmem:[%s0 + $0x1e8] sm:$0xff]
  %v209 = vld [vmem:[%s0 + $0x1f0] sm:$0xff]
  %v210 = vld [vmem:[%s0 + $0x1f8] sm:$0xff]
  %v211 = vld [vmem:[%s1] sm:$0xf]
  %v212 = vld [vmem:[%s1 + $0x4] sm:$0xf]
  %v213 = vld [vmem:[%s1 + $0x8] sm:$0xf]
  %v214 = vld [vmem:[%s1 + $0xc] sm:$0xf]
  %v215 = vld [vmem:[%s1 + $0x10] sm:$0xf]
  %v216 = vld [vmem:[%s1 + $0x14] sm:$0xf]
  %v217 = vld [vmem:[%s1 + $0x18] sm:$0xf]
  %v218 = vld [vmem:[%s1 + $0x1c] sm:$0xf]
  %v219 = vld [vmem:[%s1 + $0x20] sm:$0xf]
  %v220 = vld [vmem:[%s1 + $0x24] sm:$0xf]
  %v221 = vld [vmem:[%s1 + $0x28] sm:$0xf]
  %v222 = vld [vmem:[%s1 + $0x2c] sm:$0xf]
  %v223 = vld [vmem:[%s1 + $0x30] sm:$0xf]
  %v224 = vld [vmem:[%s1 + $0x34] sm:$0xf]
  %v225 = vld [vmem:[%s1 + $0x38] sm:$0xf]
  %v226 = vld [vmem:[%s1 + $0x3c] sm:$0xf]
  %v227 = vld [vmem:[%s1 + $0x40] sm:$0xf]
  %v228 = vld [vmem:[%s1 + $0x44] sm:$0xf]
  %v229 = vld [vmem:[%s1 + $0x48] sm:$0xf]
  %v230 = vld [vmem:[%s1 + $0x4c] sm:$0xf]
  %v231 = vld [vmem:[%s1 + $0x50] sm:$0xf]
  %v232 = vld [vmem:[%s1 + $0x54] sm:$0xf]
  %v233 = vld [vmem:[%s1 + $0x58] sm:$0xf]
  %v234 = vld [vmem:[%s1 + $0x5c] sm:$0xf]
  %v235 = vld [vmem:[%s1 + $0x60] sm:$0xf]
  %v236 = vld [vmem:[%s1 + $0x64] sm:$0xf]
  %v237 = vld [vmem:[%s1 + $0x68] sm:$0xf]
  %v238 = vld [vmem:[%s1 + $0x6c] sm:$0xf]
  %v239 = vld [vmem:[%s1 + $0x70] sm:$0xf]
  %v240 = vld [vmem:[%s1 + $0x74] sm:$0xf]
  %v241 = vld [vmem:[%s1 + $0x78] sm:$0xf]
  %v242 = vld [vmem:[%s1 + $0x7c] sm:$0xf]
  %v307 = vunpack.c.l.b16 %v147
  %v308 = vunpack.c.h.b16 %v147
  %v309 = vunpack.c.l.b16 %v148
  %v310 = vunpack.c.h.b16 %v148
  %v311 = vunpack.c.l.b16 %v149
  %v312 = vunpack.c.h.b16 %v149
  %v313 = vunpack.c.l.b16 %v150
  %v314 = vunpack.c.h.b16 %v150
  %v315 = vunpack.c.l.b16 %v151
  %v316 = vunpack.c.h.b16 %v151
  %v317 = vunpack.c.l.b16 %v152
  %v318 = vunpack.c.h.b16 %v152
  %v319 = vunpack.c.l.b16 %v153
  %v320 = vunpack.c.h.b16 %v153
  %v321 = vunpack.c.l.b16 %v154
  %v322 = vunpack.c.h.b16 %v154
  %v323 = vunpack.c.l.b16 %v155
  %v324 = vunpack.c.h.b16 %v155
  %v325 = vunpack.c.l.b16 %v156
  %v326 = vunpack.c.h.b16 %v156
  %v327 = vunpack.c.l.b16 %v157
  %v328 = vunpack.c.h.b16 %v157
  %v329 = vunpack.c.l.b16 %v158
  %v330 = vunpack.c.h.b16 %v158
  %v331 = vunpack.c.l.b16 %v159
  %v332 = vunpack.c.h.b16 %v159
  %v333 = vunpack.c.l.b16 %v160
  %v334 = vunpack.c.h.b16 %v160
  %v335 = vunpack.c.l.b16 %v161
  %v336 = vunpack.c.h.b16 %v161
  %v337 = vunpack.c.l.b16 %v162
  %v338 = vunpack.c.h.b16 %v162
  %v339 = vunpack.c.l.b16 %v163
  %v340 = vunpack.c.h.b16 %v163
  %v341 = vunpack.c.l.b16 %v164
  %v342 = vunpack.c.h.b16 %v164
  %v343 = vunpack.c.l.b16 %v165
  %v344 = vunpack.c.h.b16 %v165
  %v345 = vunpack.c.l.b16 %v166
  %v346 = vunpack.c.h.b16 %v166
  %v347 = vunpack.c.l.b16 %v167
  %v348 = vunpack.c.h.b16 %v167
  %v349 = vunpack.c.l.b16 %v168
  %v350 = vunpack.c.h.b16 %v168
  %v351 = vunpack.c.l.b16 %v169
  %v352 = vunpack.c.h.b16 %v169
  %v353 = vunpack.c.l.b16 %v170
  %v354 = vunpack.c.h.b16 %v170
  %v355 = vunpack.c.l.b16 %v171
  %v356 = vunpack.c.h.b16 %v171
  %v357 = vunpack.c.l.b16 %v172
  %v358 = vunpack.c.h.b16 %v172
  %v359 = vunpack.c.l.b16 %v173
  %v360 = vunpack.c.h.b16 %v173
  %v361 = vunpack.c.l.b16 %v174
  %v362 = vunpack.c.h.b16 %v174
  %v363 = vunpack.c.l.b16 %v175
  %v364 = vunpack.c.h.b16 %v175
  %v365 = vunpack.c.l.b16 %v176
  %v366 = vunpack.c.h.b16 %v176
  %v367 = vunpack.c.l.b16 %v177
  %v368 = vunpack.c.h.b16 %v177
  %v369 = vunpack.c.l.b16 %v178
  %v370 = vunpack.c.h.b16 %v178
  %v371 = vunpack.c.l.b16 %v179
  %v372 = vunpack.c.h.b16 %v179
  %v373 = vunpack.c.l.b16 %v180
  %v374 = vunpack.c.h.b16 %v180
  %v375 = vunpack.c.l.b16 %v181
  %v376 = vunpack.c.h.b16 %v181
  %v377 = vunpack.c.l.b16 %v182
  %v378 = vunpack.c.h.b16 %v182
  %v379 = vunpack.c.l.b16 %v183
  %v380 = vunpack.c.h.b16 %v183
  %v381 = vunpack.c.l.b16 %v184
  %v382 = vunpack.c.h.b16 %v184
  %v383 = vunpack.c.l.b16 %v185
  %v384 = vunpack.c.h.b16 %v185
  %v385 = vunpack.c.l.b16 %v186
  %v386 = vunpack.c.h.b16 %v186
  %v387 = vunpack.c.l.b16 %v187
  %v388 = vunpack.c.h.b16 %v187
  %v389 = vunpack.c.l.b16 %v188
  %v390 = vunpack.c.h.b16 %v188
  %v391 = vunpack.c.l.b16 %v189
  %v392 = vunpack.c.h.b16 %v189
  %v393 = vunpack.c.l.b16 %v190
  %v394 = vunpack.c.h.b16 %v190
  %v395 = vunpack.c.l.b16 %v191
  %v396 = vunpack.c.h.b16 %v191
  %v397 = vunpack.c.l.b16 %v192
  %v398 = vunpack.c.h.b16 %v192
  %v399 = vunpack.c.l.b16 %v193
  %v400 = vunpack.c.h.b16 %v193
  %v401 = vunpack.c.l.b16 %v194
  %v402 = vunpack.c.h.b16 %v194
  %v403 = vunpack.c.l.b16 %v195
  %v404 = vunpack.c.h.b16 %v195
  %v405 = vunpack.c.l.b16 %v196
  %v406 = vunpack.c.h.b16 %v196
  %v407 = vunpack.c.l.b16 %v197
  %v408 = vunpack.c.h.b16 %v197
  %v409 = vunpack.c.l.b16 %v198
  %v410 = vunpack.c.h.b16 %v198
  %v411 = vunpack.c.l.b16 %v199
  %v412 = vunpack.c.h.b16 %v199
  %v413 = vunpack.c.l.b16 %v200
  %v414 = vunpack.c.h.b16 %v200
  %v415 = vunpack.c.l.b16 %v201
  %v416 = vunpack.c.h.b16 %v201
  %v417 = vunpack.c.l.b16 %v202
  %v418 = vunpack.c.h.b16 %v202
  %v419 = vunpack.c.l.b16 %v203
  %v420 = vunpack.c.h.b16 %v203
  %v421 = vunpack.c.l.b16 %v204
  %v422 = vunpack.c.h.b16 %v204
  %v423 = vunpack.c.l.b16 %v205
  %v424 = vunpack.c.h.b16 %v205
  %v425 = vunpack.c.l.b16 %v206
  %v426 = vunpack.c.h.b16 %v206
  %v427 = vunpack.c.l.b16 %v207
  %v428 = vunpack.c.h.b16 %v207
  %v429 = vunpack.c.l.b16 %v208
  %v430 = vunpack.c.h.b16 %v208
  %v431 = vunpack.c.l.b16 %v209
  %v432 = vunpack.c.h.b16 %v209
  %v433 = vunpack.c.l.b16 %v210
  %v434 = vunpack.c.h.b16 %v210
  %v435 = vpack.c.b16 %v309, %v307
  %v436 = vpack.c.b16 %v310, %v308
  %v437 = vpack.c.b16 %v313, %v311
  %v438 = vpack.c.b16 %v314, %v312
  %v439 = vpack.c.b16 %v317, %v315
  %v440 = vpack.c.b16 %v318, %v316
  %v441 = vpack.c.b16 %v321, %v319
  %v442 = vpack.c.b16 %v322, %v320
  %v443 = vpack.c.b16 %v325, %v323
  %v444 = vpack.c.b16 %v326, %v324
  %v445 = vpack.c.b16 %v329, %v327
  %v446 = vpack.c.b16 %v330, %v328
  %v447 = vpack.c.b16 %v333, %v331
  %v448 = vpack.c.b16 %v334, %v332
  %v449 = vpack.c.b16 %v337, %v335
  %v450 = vpack.c.b16 %v338, %v336
  %v451 = vpack.c.b16 %v341, %v339
  %v452 = vpack.c.b16 %v342, %v340
  %v453 = vpack.c.b16 %v345, %v343
  %v454 = vpack.c.b16 %v346, %v344
  %v455 = vpack.c.b16 %v349, %v347
  %v456 = vpack.c.b16 %v350, %v348
  %v457 = vpack.c.b16 %v353, %v351
  %v458 = vpack.c.b16 %v354, %v352
  %v459 = vpack.c.b16 %v357, %v355
  %v460 = vpack.c.b16 %v358, %v356
  %v461 = vpack.c.b16 %v361, %v359
  %v462 = vpack.c.b16 %v362, %v360
  %v463 = vpack.c.b16 %v365, %v363
  %v464 = vpack.c.b16 %v366, %v364
  %v465 = vpack.c.b16 %v369, %v367
  %v466 = vpack.c.b16 %v370, %v368
  %v467 = vpack.c.b16 %v373, %v371
  %v468 = vpack.c.b16 %v374, %v372
  %v469 = vpack.c.b16 %v377, %v375
  %v470 = vpack.c.b16 %v378, %v376
  %v471 = vpack.c.b16 %v381, %v379
  %v472 = vpack.c.b16 %v382, %v380
  %v473 = vpack.c.b16 %v385, %v383
  %v474 = vpack.c.b16 %v386, %v384
  %v475 = vpack.c.b16 %v389, %v387
  %v476 = vpack.c.b16 %v390, %v388
  %v477 = vpack.c.b16 %v393, %v391
  %v478 = vpack.c.b16 %v394, %v392
  %v479 = vpack.c.b16 %v397, %v395
  %v480 = vpack.c.b16 %v398, %v396
  %v481 = vpack.c.b16 %v401, %v399
  %v482 = vpack.c.b16 %v402, %v400
  %v483 = vpack.c.b16 %v405, %v403
  %v484 = vpack.c.b16 %v406, %v404
  %v485 = vpack.c.b16 %v409, %v407
  %v486 = vpack.c.b16 %v410, %v408
  %v487 = vpack.c.b16 %v413, %v411
  %v488 = vpack.c.b16 %v414, %v412
  %v489 = vpack.c.b16 %v417, %v415
  %v490 = vpack.c.b16 %v418, %v416
  %v491 = vpack.c.b16 %v421, %v419
  %v492 = vpack.c.b16 %v422, %v420
  %v493 = vpack.c.b16 %v425, %v423
  %v494 = vpack.c.b16 %v426, %v424
  %v495 = vpack.c.b16 %v429, %v427
  %v496 = vpack.c.b16 %v430, %v428
  %v497 = vpack.c.b16 %v433, %v431
  %v498 = vpack.c.b16 %v434, %v432
  %v595 = vunpack.c.l.b16 %v211
  %v596 = vunpack.c.l.b16 %v212
  %v597 = vunpack.c.l.b16 %v213
  %v598 = vunpack.c.l.b16 %v214
  %v599 = vunpack.c.l.b16 %v215
  %v600 = vunpack.c.l.b16 %v216
  %v601 = vunpack.c.l.b16 %v217
  %v602 = vunpack.c.l.b16 %v218
  %v603 = vunpack.c.l.b16 %v219
  %v604 = vunpack.c.l.b16 %v220
  %v605 = vunpack.c.l.b16 %v221
  %v606 = vunpack.c.l.b16 %v222
  %v607 = vunpack.c.l.b16 %v223
  %v608 = vunpack.c.l.b16 %v224
  %v609 = vunpack.c.l.b16 %v225
  %v610 = vunpack.c.l.b16 %v226
  %v611 = vunpack.c.l.b16 %v227
  %v612 = vunpack.c.l.b16 %v228
  %v613 = vunpack.c.l.b16 %v229
  %v614 = vunpack.c.l.b16 %v230
  %v615 = vunpack.c.l.b16 %v231
  %v616 = vunpack.c.l.b16 %v232
  %v617 = vunpack.c.l.b16 %v233
  %v618 = vunpack.c.l.b16 %v234
  %v619 = vunpack.c.l.b16 %v235
  %v620 = vunpack.c.l.b16 %v236
  %v621 = vunpack.c.l.b16 %v237
  %v622 = vunpack.c.l.b16 %v238
  %v623 = vunpack.c.l.b16 %v239
  %v624 = vunpack.c.l.b16 %v240
  %v625 = vunpack.c.l.b16 %v241
  %v626 = vunpack.c.l.b16 %v242
  %v627 = vpack.c.b16 %v596, %v595
  %v628 = vpack.c.b16 %v598, %v597
  %v629 = vpack.c.b16 %v600, %v599
  %v630 = vpack.c.b16 %v602, %v601
  %v631 = vpack.c.b16 %v604, %v603
  %v632 = vpack.c.b16 %v606, %v605
  %v633 = vpack.c.b16 %v608, %v607
  %v634 = vpack.c.b16 %v610, %v609
  %v635 = vpack.c.b16 %v612, %v611
  %v636 = vpack.c.b16 %v614, %v613
  %v637 = vpack.c.b16 %v616, %v615
  %v638 = vpack.c.b16 %v618, %v617
  %v639 = vpack.c.b16 %v620, %v619
  %v640 = vpack.c.b16 %v622, %v621
  %v641 = vpack.c.b16 %v624, %v623
  %v642 = vpack.c.b16 %v626, %v625
  %659 = vmatprep.subr.bf16.mxu0 0
  %660 = vmatpush1.bf16.msra.mxu0 %v627
  %661 = vmatprep.subr.bf16.mxu0 0
  %662 = vmatpush1.bf16.msra.mxu0 %v628
  %663 = vmatprep.subr.bf16.mxu0 0
  %664 = vmatpush1.bf16.msra.mxu0 %v629
  %665 = vmatprep.subr.bf16.mxu0 0
  %666 = vmatpush1.bf16.msra.mxu0 %v630
  %667 = vmatprep.subr.bf16.mxu0 0
  %668 = vmatpush1.bf16.msra.mxu0 %v631
  %669 = vmatprep.subr.bf16.mxu0 0
  %670 = vmatpush1.bf16.msra.mxu0 %v632
  %671 = vmatprep.subr.bf16.mxu0 0
  %672 = vmatpush1.bf16.msra.mxu0 %v633
  %673 = vmatprep.subr.bf16.mxu0 0
  %674 = vmatpush1.bf16.msra.mxu0 %v634
  %675 = vmatprep.subr.bf16.mxu0 0
  %676 = vmatpush1.bf16.msra.mxu0 %v635
  %677 = vmatprep.subr.bf16.mxu0 0
  %678 = vmatpush1.bf16.msra.mxu0 %v636
  %679 = vmatprep.subr.bf16.mxu0 0
  %680 = vmatpush1.bf16.msra.mxu0 %v637
  %681 = vmatprep.subr.bf16.mxu0 0
  %682 = vmatpush1.bf16.msra.mxu0 %v638
  %683 = vmatprep.subr.bf16.mxu0 0
  %684 = vmatpush1.bf16.msra.mxu0 %v639
  %685 = vmatprep.subr.bf16.mxu0 0
  %686 = vmatpush1.bf16.msra.mxu0 %v640
  %687 = vmatprep.subr.bf16.mxu0 0
  %688 = vmatpush1.bf16.msra.mxu0 %v641
  %689 = vmatprep.subr.bf16.mxu0 0
  %690 = vmatpush1.bf16.msra.mxu0 %v642
  %691 = vmatprep.mubr.bf16.mxu0 %v436
  %692 = vmatmul.mubr.bf16.gmra.mrb[0].mxu0 %v435
  %v693 = vpop.f32.mrb[0].mxu0
  %v694 = vadd.f32 0.0, %v693
  %v695 = vpop.f32.mrb[0].mxu0
  %v696 = vpop.f32.mrb[0].mxu0
  %v697 = vadd.f32 0.0, %v696
  %v698 = vpop.f32.mrb[0].mxu0
  %699 = vmatprep.mubr.bf16.mxu0 %v438
  %700 = vmatmul.mubr.bf16.gmra.mrb[0].mxu0 %v437
  %v701 = vpop.f32.mrb[0].mxu0
  %v702 = vadd.f32 0.0, %v701
  %v703 = vpop.f32.mrb[0].mxu0
  %v704 = vpop.f32.mrb[0].mxu0
  %v705 = vadd.f32 0.0, %v704
  %v706 = vpop.f32.mrb[0].mxu0
  %707 = vmatprep.mubr.bf16.mxu0 %v440
  %708 = vmatmul.mubr.bf16.gmra.mrb[0].mxu0 %v439
  %v709 = vpop.f32.mrb[0].mxu0
  %v710 = vadd.f32 0.0, %v709
  %v711 = vpop.f32.mrb[0].mxu0
  %v712 = vpop.f32.mrb[0].mxu0
  %v713 = vadd.f32 0.0, %v712
  %v714 = vpop.f32.mrb[0].mxu0
  %715 = vmatprep.mubr.bf16.mxu0 %v442
  %716 = vmatmul.mubr.bf16.gmra.mrb[0].mxu0 %v441
  %v717 = vpop.f32.mrb[0].mxu0
  %v718 = vadd.f32 0.0, %v717
  %v719 = vpop.f32.mrb[0].mxu0
  %v720 = vpop.f32.mrb[0].mxu0
  %v721 = vadd.f32 0.0, %v720
  %v722 = vpop.f32.mrb[0].mxu0
  %723 = vmatprep.mubr.bf16.mxu0 %v444
  %724 = vmatmul.mubr.bf16.gmra.mrb[0].mxu0 %v443
  %v725 = vpop.f32.mrb[0].mxu0
  %v726 = vadd.f32 0.0, %v725
  %v727 = vpop.f32.mrb[0].mxu0
  %v728 = vpop.f32.mrb[0].mxu0
  %v729 = vadd.f32 0.0, %v728
  %v730 = vpop.f32.mrb[0].mxu0
  %731 = vmatprep.mubr.bf16.mxu0 %v446
  %732 = vmatmul.mubr.bf16.gmra.mrb[0].mxu0 %v445
  %v733 = vpop.f32.mrb[0].mxu0
  %v734 = vadd.f32 0.0, %v733
  %v735 = vpop.f32.mrb[0].mxu0
  %v736 = vpop.f32.mrb[0].mxu0
  %v737 = vadd.f32 0.0, %v736
  %v738 = vpop.f32.mrb[0].mxu0
  %739 = vmatprep.mubr.bf16.mxu0 %v448
  %740 = vmatmul.mubr.bf16.gmra.mrb[0].mxu0 %v447
  %v741 = vpop.f32.mrb[0].mxu0
  %v742 = vadd.f32 0.0, %v741
  %v743 = vpop.f32.mrb[0].mxu0
  %v744 = vpop.f32.mrb[0].mxu0
  %v745 = vadd.f32 0.0, %v744
  %v746 = vpop.f32.mrb[0].mxu0
  %747 = vmatprep.mubr.bf16.mxu0 %v450
  %748 = vmatmul.mubr.bf16.gmra.mrb[0].mxu0 %v449
  %v749 = vpop.f32.mrb[0].mxu0
  %v750 = vadd.f32 0.0, %v749
  %v751 = vpop.f32.mrb[0].mxu0
  %v752 = vpop.f32.mrb[0].mxu0
  %v753 = vadd.f32 0.0, %v752
  %v754 = vpop.f32.mrb[0].mxu0
  %755 = vmatprep.mubr.bf16.mxu0 %v452
  %756 = vmatmul.mubr.bf16.gmra.mrb[0].mxu0 %v451
  %v757 = vpop.f32.mrb[0].mxu0
  %v758 = vadd.f32 0.0, %v757
  %v759 = vpop.f32.mrb[0].mxu0
  %v760 = vpop.f32.mrb[0].mxu0
  %v761 = vadd.f32 0.0, %v760
  %v762 = vpop.f32.mrb[0].mxu0
  %763 = vmatprep.mubr.bf16.mxu0 %v454
  %764 = vmatmul.mubr.bf16.gmra.mrb[0].mxu0 %v453
  %v765 = vpop.f32.mrb[0].mxu0
  %v766 = vadd.f32 0.0, %v765
  %v767 = vpop.f32.mrb[0].mxu0
  %v768 = vpop.f32.mrb[0].mxu0
  %v769 = vadd.f32 0.0, %v768
  %v770 = vpop.f32.mrb[0].mxu0
  %771 = vmatprep.mubr.bf16.mxu0 %v456
  %772 = vmatmul.mubr.bf16.gmra.mrb[0].mxu0 %v455
  %v773 = vpop.f32.mrb[0].mxu0
  %v774 = vadd.f32 0.0, %v773
  %v775 = vpop.f32.mrb[0].mxu0
  %v776 = vpop.f32.mrb[0].mxu0
  %v777 = vadd.f32 0.0, %v776
  %v778 = vpop.f32.mrb[0].mxu0
  %779 = vmatprep.mubr.bf16.mxu0 %v458
  %780 = vmatmul.mubr.bf16.gmra.mrb[0].mxu0 %v457
  %v781 = vpop.f32.mrb[0].mxu0
  %v782 = vadd.f32 0.0, %v781
  %v783 = vpop.f32.mrb[0].mxu0
  %v784 = vpop.f32.mrb[0].mxu0
  %v785 = vadd.f32 0.0, %v784
  %v786 = vpop.f32.mrb[0].mxu0
  %787 = vmatprep.mubr.bf16.mxu0 %v460
  %788 = vmatmul.mubr.bf16.gmra.mrb[0].mxu0 %v459
  %v789 = vpop.f32.mrb[0].mxu0
  %v790 = vadd.f32 0.0, %v789
  %v791 = vpop.f32.mrb[0].mxu0
  %v792 = vpop.f32.mrb[0].mxu0
  %v793 = vadd.f32 0.0, %v792
  %v794 = vpop.f32.mrb[0].mxu0
  %795 = vmatprep.mubr.bf16.mxu0 %v462
  %796 = vmatmul.mubr.bf16.gmra.mrb[0].mxu0 %v461
  %v797 = vpop.f32.mrb[0].mxu0
  %v798 = vadd.f32 0.0, %v797
  %v799 = vpop.f32.mrb[0].mxu0
  %v800 = vpop.f32.mrb[0].mxu0
  %v801 = vadd.f32 0.0, %v800
  %v802 = vpop.f32.mrb[0].mxu0
  %803 = vmatprep.mubr.bf16.mxu0 %v464
  %804 = vmatmul.mubr.bf16.gmra.mrb[0].mxu0 %v463
  %v805 = vpop.f32.mrb[0].mxu0
  %v806 = vadd.f32 0.0, %v805
  %v807 = vpop.f32.mrb[0].mxu0
  %v808 = vpop.f32.mrb[0].mxu0
  %v809 = vadd.f32 0.0, %v808
  %v810 = vpop.f32.mrb[0].mxu0
  %811 = vmatprep.mubr.bf16.mxu0 %v466
  %812 = vmatmul.mubr.bf16.gmra.mrb[0].mxu0 %v465
  %v813 = vpop.f32.mrb[0].mxu0
  %v814 = vadd.f32 0.0, %v813
  %v815 = vpop.f32.mrb[0].mxu0
  %v816 = vpop.f32.mrb[0].mxu0
  %v817 = vadd.f32 0.0, %v816
  %v818 = vpop.f32.mrb[0].mxu0
  %819 = vmatprep.mubr.bf16.mxu0 %v468
  %820 = vmatmul.mubr.bf16.gmra.mrb[0].mxu0 %v467
  %v821 = vpop.f32.mrb[0].mxu0
  %v822 = vadd.f32 0.0, %v821
  %v823 = vpop.f32.mrb[0].mxu0
  %v824 = vpop.f32.mrb[0].mxu0
  %v825 = vadd.f32 0.0, %v824
  %v826 = vpop.f32.mrb[0].mxu0
  %827 = vmatprep.mubr.bf16.mxu0 %v470
  %828 = vmatmul.mubr.bf16.gmra.mrb[0].mxu0 %v469
  %v829 = vpop.f32.mrb[0].mxu0
  %v830 = vadd.f32 0.0, %v829
  %v831 = vpop.f32.mrb[0].mxu0
  %v832 = vpop.f32.mrb[0].mxu0
  %v833 = vadd.f32 0.0, %v832
  %v834 = vpop.f32.mrb[0].mxu0
  %835 = vmatprep.mubr.bf16.mxu0 %v472
  %836 = vmatmul.mubr.bf16.gmra.mrb[0].mxu0 %v471
  %v837 = vpop.f32.mrb[0].mxu0
  %v838 = vadd.f32 0.0, %v837
  %v839 = vpop.f32.mrb[0].mxu0
  %v840 = vpop.f32.mrb[0].mxu0
  %v841 = vadd.f32 0.0, %v840
  %v842 = vpop.f32.mrb[0].mxu0
  %843 = vmatprep.mubr.bf16.mxu0 %v474
  %844 = vmatmul.mubr.bf16.gmra.mrb[0].mxu0 %v473
  %v845 = vpop.f32.mrb[0].mxu0
  %v846 = vadd.f32 0.0, %v845
  %v847 = vpop.f32.mrb[0].mxu0
  %v848 = vpop.f32.mrb[0].mxu0
  %v849 = vadd.f32 0.0, %v848
  %v850 = vpop.f32.mrb[0].mxu0
  %851 = vmatprep.mubr.bf16.mxu0 %v476
  %852 = vmatmul.mubr.bf16.gmra.mrb[0].mxu0 %v475
  %v853 = vpop.f32.mrb[0].mxu0
  %v854 = vadd.f32 0.0, %v853
  %v855 = vpop.f32.mrb[0].mxu0
  %v856 = vpop.f32.mrb[0].mxu0
  %v857 = vadd.f32 0.0, %v856
  %v858 = vpop.f32.mrb[0].mxu0
  %859 = vmatprep.mubr.bf16.mxu0 %v478
  %860 = vmatmul.mubr.bf16.gmra.mrb[0].mxu0 %v477
  %v861 = vpop.f32.mrb[0].mxu0
  %v862 = vadd.f32 0.0, %v861
  %v863 = vpop.f32.mrb[0].mxu0
  %v864 = vpop.f32.mrb[0].mxu0
  %v865 = vadd.f32 0.0, %v864
  %v866 = vpop.f32.mrb[0].mxu0
  %867 = vmatprep.mubr.bf16.mxu0 %v480
  %868 = vmatmul.mubr.bf16.gmra.mrb[0].mxu0 %v479
  %v869 = vpop.f32.mrb[0].mxu0
  %v870 = vadd.f32 0.0, %v869
  %v871 = vpop.f32.mrb[0].mxu0
  %v872 = vpop.f32.mrb[0].mxu0
  %v873 = vadd.f32 0.0, %v872
  %v874 = vpop.f32.mrb[0].mxu0
  %875 = vmatprep.mubr.bf16.mxu0 %v482
  %876 = vmatmul.mubr.bf16.gmra.mrb[0].mxu0 %v481
  %v877 = vpop.f32.mrb[0].mxu0
  %v878 = vadd.f32 0.0, %v877
  %v879 = vpop.f32.mrb[0].mxu0
  %v880 = vpop.f32.mrb[0].mxu0
  %v881 = vadd.f32 0.0, %v880
  %v882 = vpop.f32.mrb[0].mxu0
  %883 = vmatprep.mubr.bf16.mxu0 %v484
  %884 = vmatmul.mubr.bf16.gmra.mrb[0].mxu0 %v483
  %v885 = vpop.f32.mrb[0].mxu0
  %v886 = vadd.f32 0.0, %v885
  %v887 = vpop.f32.mrb[0].mxu0
  %v888 = vpop.f32.mrb[0].mxu0
  %v889 = vadd.f32 0.0, %v888
  %v890 = vpop.f32.mrb[0].mxu0
  %891 = vmatprep.mubr.bf16.mxu0 %v486
  %892 = vmatmul.mubr.bf16.gmra.mrb[0].mxu0 %v485
  %v893 = vpop.f32.mrb[0].mxu0
  %v894 = vadd.f32 0.0, %v893
  %v895 = vpop.f32.mrb[0].mxu0
  %v896 = vpop.f32.mrb[0].mxu0
  %v897 = vadd.f32 0.0, %v896
  %v898 = vpop.f32.mrb[0].mxu0
  %899 = vmatprep.mubr.bf16.mxu0 %v488
  %900 = vmatmul.mubr.bf16.gmra.mrb[0].mxu0 %v487
  %v901 = vpop.f32.mrb[0].mxu0
  %v902 = vadd.f32 0.0, %v901
  %v903 = vpop.f32.mrb[0].mxu0
  %v904 = vpop.f32.mrb[0].mxu0
  %v905 = vadd.f32 0.0, %v904
  %v906 = vpop.f32.mrb[0].mxu0
  %907 = vmatprep.mubr.bf16.mxu0 %v490
  %908 = vmatmul.mubr.bf16.gmra.mrb[0].mxu0 %v489
  %v909 = vpop.f32.mrb[0].mxu0
  %v910 = vadd.f32 0.0, %v909
  %v911 = vpop.f32.mrb[0].mxu0
  %v912 = vpop.f32.mrb[0].mxu0
  %v913 = vadd.f32 0.0, %v912
  %v914 = vpop.f32.mrb[0].mxu0
  %915 = vmatprep.mubr.bf16.mxu0 %v492
  %916 = vmatmul.mubr.bf16.gmra.mrb[0].mxu0 %v491
  %v917 = vpop.f32.mrb[0].mxu0
  %v918 = vadd.f32 0.0, %v917
  %v919 = vpop.f32.mrb[0].mxu0
  %v920 = vpop.f32.mrb[0].mxu0
  %v921 = vadd.f32 0.0, %v920
  %v922 = vpop.f32.mrb[0].mxu0
  %923 = vmatprep.mubr.bf16.mxu0 %v494
  %924 = vmatmul.mubr.bf16.gmra.mrb[0].mxu0 %v493
  %v925 = vpop.f32.mrb[0].mxu0
  %v926 = vadd.f32 0.0, %v925
  %v927 = vpop.f32.mrb[0].mxu0
  %v928 = vpop.f32.mrb[0].mxu0
  %v929 = vadd.f32 0.0, %v928
  %v930 = vpop.f32.mrb[0].mxu0
  %931 = vmatprep.mubr.bf16.mxu0 %v496
  %932 = vmatmul.mubr.bf16.gmra.mrb[0].mxu0 %v495
  %v933 = vpop.f32.mrb[0].mxu0
  %v934 = vadd.f32 0.0, %v933
  %v935 = vpop.f32.mrb[0].mxu0
  %v936 = vpop.f32.mrb[0].mxu0
  %v937 = vadd.f32 0.0, %v936
  %v938 = vpop.f32.mrb[0].mxu0
  %939 = vmatprep.mubr.bf16.mxu0 %v498
  %940 = vmatmul.mubr.bf16.gmra.mrb[0].mxu0 %v497
  %v941 = vpop.f32.mrb[0].mxu0
  %v942 = vadd.f32 0.0, %v941
  %v943 = vpop.f32.mrb[0].mxu0
  %v944 = vpop.f32.mrb[0].mxu0
  %v945 = vadd.f32 0.0, %v944
  %v946 = vpop.f32.mrb[0].mxu0
  %947 = vdwg.mxu0
  %v948 = vadd.f32 %v83, %v694
  %v949 = vadd.f32 %v84, %v697
  %v950 = vadd.f32 %v85, %v702
  %v951 = vadd.f32 %v86, %v705
  %v952 = vadd.f32 %v87, %v710
  %v953 = vadd.f32 %v88, %v713
  %v954 = vadd.f32 %v89, %v718
  %v955 = vadd.f32 %v90, %v721
  %v956 = vadd.f32 %v91, %v726
  %v957 = vadd.f32 %v92, %v729
  %v958 = vadd.f32 %v93, %v734
  %v959 = vadd.f32 %v94, %v737
  %v960 = vadd.f32 %v95, %v742
  %v961 = vadd.f32 %v96, %v745
  %v962 = vadd.f32 %v97, %v750
  %v963 = vadd.f32 %v98, %v753
  %v964 = vadd.f32 %v99, %v758
  %v965 = vadd.f32 %v100, %v761
  %v966 = vadd.f32 %v101, %v766
  %v967 = vadd.f32 %v102, %v769
  %v968 = vadd.f32 %v103, %v774
  %v969 = vadd.f32 %v104, %v777
  %v970 = vadd.f32 %v105, %v782
  %v971 = vadd.f32 %v106, %v785
  %v972 = vadd.f32 %v107, %v790
  %v973 = vadd.f32 %v108, %v793
  %v974 = vadd.f32 %v109, %v798
  %v975 = vadd.f32 %v110, %v801
  %v976 = vadd.f32 %v111, %v806
  %v977 = vadd.f32 %v112, %v809
  %v978 = vadd.f32 %v113, %v814
  %v979 = vadd.f32 %v114, %v817
  %v980 = vadd.f32 %v115, %v822
  %v981 = vadd.f32 %v116, %v825
  %v982 = vadd.f32 %v117, %v830
  %v983 = vadd.f32 %v118, %v833
  %v984 = vadd.f32 %v119, %v838
  %v985 = vadd.f32 %v120, %v841
  %v986 = vadd.f32 %v121, %v846
  %v987 = vadd.f32 %v122, %v849
  %v988 = vadd.f32 %v123, %v854
  %v989 = vadd.f32 %v124, %v857
  %v990 = vadd.f32 %v125, %v862
  %v991 = vadd.f32 %v126, %v865
  %v992 = vadd.f32 %v127, %v870
  %v993 = vadd.f32 %v128, %v873
  %v994 = vadd.f32 %v129, %v878
  %v995 = vadd.f32 %v130, %v881
  %v996 = vadd.f32 %v131, %v886
  %v997 = vadd.f32 %v132, %v889
  %v998 = vadd.f32 %v133, %v894
  %v999 = vadd.f32 %v134, %v897
  %v1000 = vadd.f32 %v135, %v902
  %v1001 = vadd.f32 %v136, %v905
  %v1002 = vadd.f32 %v137, %v910
  %v1003 = vadd.f32 %v138, %v913
  %v1004 = vadd.f32 %v139, %v918
  %v1005 = vadd.f32 %v140, %v921
  %v1006 = vadd.f32 %v141, %v926
  %v1007 = vadd.f32 %v142, %v929
  %v1008 = vadd.f32 %v143, %v934
  %v1009 = vadd.f32 %v144, %v937
  %v1010 = vadd.f32 %v145, %v942
  %v1011 = vadd.f32 %v146, %v945
  %1012 = vst [vmem:[#allocation2] sm:$0xff] %v948
  %1013 = vst [vmem:[#allocation2 + $0x8] sm:$0xff] %v949
  %1014 = vst [vmem:[#allocation2 + $0x10] sm:$0xff] %v950
  %1015 = vst [vmem:[#allocation2 + $0x18] sm:$0xff] %v951
  %1016 = vst [vmem:[#allocation2 + $0x20] sm:$0xff] %v952
  %1017 = vst [vmem:[#allocation2 + $0x28] sm:$0xff] %v953
  %1018 = vst [vmem:[#allocation2 + $0x30] sm:$0xff] %v954
  %1019 = vst [vmem:[#allocation2 + $0x38] sm:$0xff] %v955
  %1020 = vst [vmem:[#allocation2 + $0x40] sm:$0xff] %v956
  %1021 = vst [vmem:[#allocation2 + $0x48] sm:$0xff] %v957
  %1022 = vst [vmem:[#allocation2 + $0x50] sm:$0xff] %v958
  %1023 = vst [vmem:[#allocation2 + $0x58] sm:$0xff] %v959
  %1024 = vst [vmem:[#allocation2 + $0x60] sm:$0xff] %v960
  %1025 = vst [vmem:[#allocation2 + $0x68] sm:$0xff] %v961
  %1026 = vst [vmem:[#allocation2 + $0x70] sm:$0xff] %v962
  %1027 = vst [vmem:[#allocation2 + $0x78] sm:$0xff] %v963
  %1028 = vst [vmem:[#allocation2 + $0x80] sm:$0xff] %v964
  %1029 = vst [vmem:[#allocation2 + $0x88] sm:$0xff] %v965
  %1030 = vst [vmem:[#allocation2 + $0x90] sm:$0xff] %v966
  %1031 = vst [vmem:[#allocation2 + $0x98] sm:$0xff] %v967
  %1032 = vst [vmem:[#allocation2 + $0xa0] sm:$0xff] %v968
  %1033 = vst [vmem:[#allocation2 + $0xa8] sm:$0xff] %v969
  %1034 = vst [vmem:[#allocation2 + $0xb0] sm:$0xff] %v970
  %1035 = vst [vmem:[#allocation2 + $0xb8] sm:$0xff] %v971
  %1036 = vst [vmem:[#allocation2 + $0xc0] sm:$0xff] %v972
  %1037 = vst [vmem:[#allocation2 + $0xc8] sm:$0xff] %v973
  %1038 = vst [vmem:[#allocation2 + $0xd0] sm:$0xff] %v974
  %1039 = vst [vmem:[#allocation2 + $0xd8] sm:$0xff] %v975
  %1040 = vst [vmem:[#allocation2 + $0xe0] sm:$0xff] %v976
  %1041 = vst [vmem:[#allocation2 + $0xe8] sm:$0xff] %v977
  %1042 = vst [vmem:[#allocation2 + $0xf0] sm:$0xff] %v978
  %1043 = vst [vmem:[#allocation2 + $0xf8] sm:$0xff] %v979
  %1044 = vst [vmem:[#allocation2 + $0x100] sm:$0xff] %v980
  %1045 = vst [vmem:[#allocation2 + $0x108] sm:$0xff] %v981
  %1046 = vst [vmem:[#allocation2 + $0x110] sm:$0xff] %v982
  %1047 = vst [vmem:[#allocation2 + $0x118] sm:$0xff] %v983
  %1048 = vst [vmem:[#allocation2 + $0x120] sm:$0xff] %v984
  %1049 = vst [vmem:[#allocation2 + $0x128] sm:$0xff] %v985
  %1050 = vst [vmem:[#allocation2 + $0x130] sm:$0xff] %v986
  %1051 = vst [vmem:[#allocation2 + $0x138] sm:$0xff] %v987
  %1052 = vst [vmem:[#allocation2 + $0x140] sm:$0xff] %v988
  %1053 = vst [vmem:[#allocation2 + $0x148] sm:$0xff] %v989
  %1054 = vst [vmem:[#allocation2 + $0x150] sm:$0xff] %v990
  %1055 = vst [vmem:[#allocation2 + $0x158] sm:$0xff] %v991
  %1056 = vst [vmem:[#allocation2 + $0x160] sm:$0xff] %v992
  %1057 = vst [vmem:[#allocation2 + $0x168] sm:$0xff] %v993
  %1058 = vst [vmem:[#allocation2 + $0x170] sm:$0xff] %v994
  %1059 = vst [vmem:[#allocation2 + $0x178] sm:$0xff] %v995
  %1060 = vst [vmem:[#allocation2 + $0x180] sm:$0xff] %v996
  %1061 = vst [vmem:[#allocation2 + $0x188] sm:$0xff] %v997
  %1062 = vst [vmem:[#allocation2 + $0x190] sm:$0xff] %v998
  %1063 = vst [vmem:[#allocation2 + $0x198] sm:$0xff] %v999
  %1064 = vst [vmem:[#allocation2 + $0x1a0] sm:$0xff] %v1000
  %1065 = vst [vmem:[#allocation2 + $0x1a8] sm:$0xff] %v1001
  %1066 = vst [vmem:[#allocation2 + $0x1b0] sm:$0xff] %v1002
  %1067 = vst [vmem:[#allocation2 + $0x1b8] sm:$0xff] %v1003
  %1068 = vst [vmem:[#allocation2 + $0x1c0] sm:$0xff] %v1004
  %1069 = vst [vmem:[#allocation2 + $0x1c8] sm:$0xff] %v1005
  %1070 = vst [vmem:[#allocation2 + $0x1d0] sm:$0xff] %v1006
  %1071 = vst [vmem:[#allocation2 + $0x1d8] sm:$0xff] %v1007
  %1072 = vst [vmem:[#allocation2 + $0x1e0] sm:$0xff] %v1008
  %1073 = vst [vmem:[#allocation2 + $0x1e8] sm:$0xff] %v1009
  %1074 = vst [vmem:[#allocation2 + $0x1f0] sm:$0xff] %v1010
  %1075 = vst [vmem:[#allocation2 + $0x1f8] sm:$0xff] %v1011
  // Predicated region
  $region18: #{_lambda_.1} parent=0 // pred_check
    %p1076 = pneg %p15
  $region19: #{_lambda_.1} parent=0 // pred_check_branch
    %1078 = sbr.rel (%p1076) target = $region21
  $region20: #{_lambda_.1} parent=0 // pred_region
    %v1079 = vld [vmem:[#allocation2] sm:$0xff]
    %v1080 = vld [vmem:[#allocation2 + $0x8] sm:$0xff]
    %v1081 = vld [vmem:[#allocation2 + $0x10] sm:$0xff]
    %v1082 = vld [vmem:[#allocation2 + $0x18] sm:$0xff]
    %v1083 = vld [vmem:[#allocation2 + $0x20] sm:$0xff]
    %v1084 = vld [vmem:[#allocation2 + $0x28] sm:$0xff]
    %v1085 = vld [vmem:[#allocation2 + $0x30] sm:$0xff]
    %v1086 = vld [vmem:[#allocation2 + $0x38] sm:$0xff]
    %v1087 = vld [vmem:[#allocation2 + $0x40] sm:$0xff]
    %v1088 = vld [vmem:[#allocation2 + $0x48] sm:$0xff]
    %v1089 = vld [vmem:[#allocation2 + $0x50] sm:$0xff]
    %v1090 = vld [vmem:[#allocation2 + $0x58] sm:$0xff]
    %v1091 = vld [vmem:[#allocation2 + $0x60] sm:$0xff]
    %v1092 = vld [vmem:[#allocation2 + $0x68] sm:$0xff]
    %v1093 = vld [vmem:[#allocation2 + $0x70] sm:$0xff]
    %v1094 = vld [vmem:[#allocation2 + $0x78] sm:$0xff]
    %v1095 = vld [vmem:[#allocation2 + $0x80] sm:$0xff]
    %v1096 = vld [vmem:[#allocation2 + $0x88] sm:$0xff]
    %v1097 = vld [vmem:[#allocation2 + $0x90] sm:$0xff]
    %v1098 = vld [vmem:[#allocation2 + $0x98] sm:$0xff]
    %v1099 = vld [vmem:[#allocation2 + $0xa0] sm:$0xff]
    %v1100 = vld [vmem:[#allocation2 + $0xa8] sm:$0xff]
    %v1101 = vld [vmem:[#allocation2 + $0xb0] sm:$0xff]
    %v1102 = vld [vmem:[#allocation2 + $0xb8] sm:$0xff]
    %v1103 = vld [vmem:[#allocation2 + $0xc0] sm:$0xff]
    %v1104 = vld [vmem:[#allocation2 + $0xc8] sm:$0xff]
    %v1105 = vld [vmem:[#allocation2 + $0xd0] sm:$0xff]
    %v1106 = vld [vmem:[#allocation2 + $0xd8] sm:$0xff]
    %v1107 = vld [vmem:[#allocation2 + $0xe0] sm:$0xff]
    %v1108 = vld [vmem:[#allocation2 + $0xe8] sm:$0xff]
    %v1109 = vld [vmem:[#allocation2 + $0xf0] sm:$0xff]
    %v1110 = vld [vmem:[#allocation2 + $0xf8] sm:$0xff]
    %v1111 = vld [vmem:[#allocation2 + $0x100] sm:$0xff]
    %v1112 = vld [vmem:[#allocation2 + $0x108] sm:$0xff]
    %v1113 = vld [vmem:[#allocation2 + $0x110] sm:$0xff]
    %v1114 = vld [vmem:[#allocation2 + $0x118] sm:$0xff]
    %v1115 = vld [vmem:[#allocation2 + $0x120] sm:$0xff]
    %v1116 = vld [vmem:[#allocation2 + $0x128] sm:$0xff]
    %v1117 = vld [vmem:[#allocation2 + $0x130] sm:$0xff]
    %v1118 = vld [vmem:[#allocation2 + $0x138] sm:$0xff]
    %v1119 = vld [vmem:[#allocation2 + $0x140] sm:$0xff]
    %v1120 = vld [vmem:[#allocation2 + $0x148] sm:$0xff]
    %v1121 = vld [vmem:[#allocation2 + $0x150] sm:$0xff]
    %v1122 = vld [vmem:[#allocation2 + $0x158] sm:$0xff]
    %v1123 = vld [vmem:[#allocation2 + $0x160] sm:$0xff]
    %v1124 = vld [vmem:[#allocation2 + $0x168] sm:$0xff]
    %v1125 = vld [vmem:[#allocation2 + $0x170] sm:$0xff]
    %v1126 = vld [vmem:[#allocation2 + $0x178] sm:$0xff]
    %v1127 = vld [vmem:[#allocation2 + $0x180] sm:$0xff]
    %v1128 = vld [vmem:[#allocation2 + $0x188] sm:$0xff]
    %v1129 = vld [vmem:[#allocation2 + $0x190] sm:$0xff]
    %v1130 = vld [vmem:[#allocation2 + $0x198] sm:$0xff]
    %v1131 = vld [vmem:[#allocation2 + $0x1a0] sm:$0xff]
    %v1132 = vld [vmem:[#allocation2 + $0x1a8] sm:$0xff]
    %v1133 = vld [vmem:[#allocation2 + $0x1b0] sm:$0xff]
    %v1134 = vld [vmem:[#allocation2 + $0x1b8] sm:$0xff]
    %v1135 = vld [vmem:[#allocation2 + $0x1c0] sm:$0xff]
    %v1136 = vld [vmem:[#allocation2 + $0x1c8] sm:$0xff]
    %v1137 = vld [vmem:[#allocation2 + $0x1d0] sm:$0xff]
    %v1138 = vld [vmem:[#allocation2 + $0x1d8] sm:$0xff]
    %v1139 = vld [vmem:[#allocation2 + $0x1e0] sm:$0xff]
    %v1140 = vld [vmem:[#allocation2 + $0x1e8] sm:$0xff]
    %v1141 = vld [vmem:[#allocation2 + $0x1f0] sm:$0xff]
    %v1142 = vld [vmem:[#allocation2 + $0x1f8] sm:$0xff]
    %v1143 = vld [vmem:[%s2] sm:$0x1]
    %v1145 = vlaneseq
    %v1146 = vshrl.u32 %v1145, 7
    %v1147 = vsub.s32 0, %v1146
    %v1148 = vrot.slane %v1143, %v1147
    %v1150 = vadd.f32 %v1079, %v1148
    %v1151 = vadd.f32 %v1080, %v1148
    %v1152 = vadd.f32 %v1081, %v1148
    %v1153 = vadd.f32 %v1082, %v1148
    %v1154 = vadd.f32 %v1083, %v1148
    %v1155 = vadd.f32 %v1084, %v1148
    %v1156 = vadd.f32 %v1085, %v1148
    %v1157 = vadd.f32 %v1086, %v1148
    %v1158 = vadd.f32 %v1087, %v1148
    %v1159 = vadd.f32 %v1088, %v1148
    %v1160 = vadd.f32 %v1089, %v1148
    %v1161 = vadd.f32 %v1090, %v1148
    %v1162 = vadd.f32 %v1091, %v1148
    %v1163 = vadd.f32 %v1092, %v1148
    %v1164 = vadd.f32 %v1093, %v1148
    %v1165 = vadd.f32 %v1094, %v1148
    %v1166 = vadd.f32 %v1095, %v1148
    %v1167 = vadd.f32 %v1096, %v1148
    %v1168 = vadd.f32 %v1097, %v1148
    %v1169 = vadd.f32 %v1098, %v1148
    %v1170 = vadd.f32 %v1099, %v1148
    %v1171 = vadd.f32 %v1100, %v1148
    %v1172 = vadd.f32 %v1101, %v1148
    %v1173 = vadd.f32 %v1102, %v1148
    %v1174 = vadd.f32 %v1103, %v1148
    %v1175 = vadd.f32 %v1104, %v1148
    %v1176 = vadd.f32 %v1105, %v1148
    %v1177 = vadd.f32 %v1106, %v1148
    %v1178 = vadd.f32 %v1107, %v1148
    %v1179 = vadd.f32 %v1108, %v1148
    %v1180 = vadd.f32 %v1109, %v1148
    %v1181 = vadd.f32 %v1110, %v1148
    %v1182 = vadd.f32 %v1111, %v1148
    %v1183 = vadd.f32 %v1112, %v1148
    %v1184 = vadd.f32 %v1113, %v1148
    %v1185 = vadd.f32 %v1114, %v1148
    %v1186 = vadd.f32 %v1115, %v1148
    %v1187 = vadd.f32 %v1116, %v1148
    %v1188 = vadd.f32 %v1117, %v1148
    %v1189 = vadd.f32 %v1118, %v1148
    %v1190 = vadd.f32 %v1119, %v1148
    %v1191 = vadd.f32 %v1120, %v1148
    %v1192 = vadd.f32 %v1121, %v1148
    %v1193 = vadd.f32 %v1122, %v1148
    %v1194 = vadd.f32 %v1123, %v1148
    %v1195 = vadd.f32 %v1124, %v1148
    %v1196 = vadd.f32 %v1125, %v1148
    %v1197 = vadd.f32 %v1126, %v1148
    %v1198 = vadd.f32 %v1127, %v1148
    %v1199 = vadd.f32 %v1128, %v1148
    %v1200 = vadd.f32 %v1129, %v1148
    %v1201 = vadd.f32 %v1130, %v1148
    %v1202 = vadd.f32 %v1131, %v1148
    %v1203 = vadd.f32 %v1132, %v1148
    %v1204 = vadd.f32 %v1133, %v1148
    %v1205 = vadd.f32 %v1134, %v1148
    %v1206 = vadd.f32 %v1135, %v1148
    %v1207 = vadd.f32 %v1136, %v1148
    %v1208 = vadd.f32 %v1137, %v1148
    %v1209 = vadd.f32 %v1138, %v1148
    %v1210 = vadd.f32 %v1139, %v1148
    %v1211 = vadd.f32 %v1140, %v1148
    %v1212 = vadd.f32 %v1141, %v1148
    %v1213 = vadd.f32 %v1142, %v1148
    %v1214 = vmax.f32 %v1150, 0.0
    %v1215 = vmax.f32 %v1151, 0.0
    %v1216 = vmax.f32 %v1152, 0.0
    %v1217 = vmax.f32 %v1153, 0.0
    %v1218 = vmax.f32 %v1154, 0.0
    %v1219 = vmax.f32 %v1155, 0.0
    %v1220 = vmax.f32 %v1156, 0.0
    %v1221 = vmax.f32 %v1157, 0.0
    %v1222 = vmax.f32 %v1158, 0.0
    %v1223 = vmax.f32 %v1159, 0.0
    %v1224 = vmax.f32 %v1160, 0.0
    %v1225 = vmax.f32 %v1161, 0.0
    %v1226 = vmax.f32 %v1162, 0.0
    %v1227 = vmax.f32 %v1163, 0.0
    %v1228 = vmax.f32 %v1164, 0.0
    %v1229 = vmax.f32 %v1165, 0.0
    %v1230 = vmax.f32 %v1166, 0.0
    %v1231 = vmax.f32 %v1167, 0.0
    %v1232 = vmax.f32 %v1168, 0.0
    %v1233 = vmax.f32 %v1169, 0.0
    %v1234 = vmax.f32 %v1170, 0.0
    %v1235 = vmax.f32 %v1171, 0.0
    %v1236 = vmax.f32 %v1172, 0.0
    %v1237 = vmax.f32 %v1173, 0.0
    %v1238 = vmax.f32 %v1174, 0.0
    %v1239 = vmax.f32 %v1175, 0.0
    %v1240 = vmax.f32 %v1176, 0.0
    %v1241 = vmax.f32 %v1177, 0.0
    %v1242 = vmax.f32 %v1178, 0.0
    %v1243 = vmax.f32 %v1179, 0.0
    %v1244 = vmax.f32 %v1180, 0.0
    %v1245 = vmax.f32 %v1181, 0.0
    %v1246 = vmax.f32 %v1182, 0.0
    %v1247 = vmax.f32 %v1183, 0.0
    %v1248 = vmax.f32 %v1184, 0.0
    %v1249 = vmax.f32 %v1185, 0.0
    %v1250 = vmax.f32 %v1186, 0.0
    %v1251 = vmax.f32 %v1187, 0.0
    %v1252 = vmax.f32 %v1188, 0.0
    %v1253 = vmax.f32 %v1189, 0.0
    %v1254 = vmax.f32 %v1190, 0.0
    %v1255 = vmax.f32 %v1191, 0.0
    %v1256 = vmax.f32 %v1192, 0.0
    %v1257 = vmax.f32 %v1193, 0.0
    %v1258 = vmax.f32 %v1194, 0.0
    %v1259 = vmax.f32 %v1195, 0.0
    %v1260 = vmax.f32 %v1196, 0.0
    %v1261 = vmax.f32 %v1197, 0.0
    %v1262 = vmax.f32 %v1198, 0.0
    %v1263 = vmax.f32 %v1199, 0.0
    %v1264 = vmax.f32 %v1200, 0.0
    %v1265 = vmax.f32 %v1201, 0.0
    %v1266 = vmax.f32 %v1202, 0.0
    %v1267 = vmax.f32 %v1203, 0.0
    %v1268 = vmax.f32 %v1204, 0.0
    %v1269 = vmax.f32 %v1205, 0.0
    %v1270 = vmax.f32 %v1206, 0.0
    %v1271 = vmax.f32 %v1207, 0.0
    %v1272 = vmax.f32 %v1208, 0.0
    %v1273 = vmax.f32 %v1209, 0.0
    %v1274 = vmax.f32 %v1210, 0.0
    %v1275 = vmax.f32 %v1211, 0.0
    %v1276 = vmax.f32 %v1212, 0.0
    %v1277 = vmax.f32 %v1213, 0.0
    %1278 = vst [vmem:[%s3] sm:$0xff] %v1214
    %1279 = vst [vmem:[%s3 + $0x8] sm:$0xff] %v1215
    %1280 = vst [vmem:[%s3 + $0x10] sm:$0xff] %v1216
    %1281 = vst [vmem:[%s3 + $0x18] sm:$0xff] %v1217
    %1282 = vst [vmem:[%s3 + $0x20] sm:$0xff] %v1218
    %1283 = vst [vmem:[%s3 + $0x28] sm:$0xff] %v1219
    %1284 = vst [vmem:[%s3 + $0x30] sm:$0xff] %v1220
    %1285 = vst [vmem:[%s3 + $0x38] sm:$0xff] %v1221
    %1286 = vst [vmem:[%s3 + $0x40] sm:$0xff] %v1222
    %1287 = vst [vmem:[%s3 + $0x48] sm:$0xff] %v1223
    %1288 = vst [vmem:[%s3 + $0x50] sm:$0xff] %v1224
    %1289 = vst [vmem:[%s3 + $0x58] sm:$0xff] %v1225
    %1290 = vst [vmem:[%s3 + $0x60] sm:$0xff] %v1226
    %1291 = vst [vmem:[%s3 + $0x68] sm:$0xff] %v1227
    %1292 = vst [vmem:[%s3 + $0x70] sm:$0xff] %v1228
    %1293 = vst [vmem:[%s3 + $0x78] sm:$0xff] %v1229
    %1294 = vst [vmem:[%s3 + $0x80] sm:$0xff] %v1230
    %1295 = vst [vmem:[%s3 + $0x88] sm:$0xff] %v1231
    %1296 = vst [vmem:[%s3 + $0x90] sm:$0xff] %v1232
    %1297 = vst [vmem:[%s3 + $0x98] sm:$0xff] %v1233
    %1298 = vst [vmem:[%s3 + $0xa0] sm:$0xff] %v1234
    %1299 = vst [vmem:[%s3 + $0xa8] sm:$0xff] %v1235
    %1300 = vst [vmem:[%s3 + $0xb0] sm:$0xff] %v1236
    %1301 = vst [vmem:[%s3 + $0xb8] sm:$0xff] %v1237
    %1302 = vst [vmem:[%s3 + $0xc0] sm:$0xff] %v1238
    %1303 = vst [vmem:[%s3 + $0xc8] sm:$0xff] %v1239
    %1304 = vst [vmem:[%s3 + $0xd0] sm:$0xff] %v1240
    %1305 = vst [vmem:[%s3 + $0xd8] sm:$0xff] %v1241
    %1306 = vst [vmem:[%s3 + $0xe0] sm:$0xff] %v1242
    %1307 = vst [vmem:[%s3 + $0xe8] sm:$0xff] %v1243
    %1308 = vst [vmem:[%s3 + $0xf0] sm:$0xff] %v1244
    %1309 = vst [vmem:[%s3 + $0xf8] sm:$0xff] %v1245
    %1310 = vst [vmem:[%s3 + $0x100] sm:$0xff] %v1246
    %1311 = vst [vmem:[%s3 + $0x108] sm:$0xff] %v1247
    %1312 = vst [vmem:[%s3 + $0x110] sm:$0xff] %v1248
    %1313 = vst [vmem:[%s3 + $0x118] sm:$0xff] %v1249
    %1314 = vst [vmem:[%s3 + $0x120] sm:$0xff] %v1250
    %1315 = vst [vmem:[%s3 + $0x128] sm:$0xff] %v1251
    %1316 = vst [vmem:[%s3 + $0x130] sm:$0xff] %v1252
    %1317 = vst [vmem:[%s3 + $0x138] sm:$0xff] %v1253
    %1318 = vst [vmem:[%s3 + $0x140] sm:$0xff] %v1254
    %1319 = vst [vmem:[%s3 + $0x148] sm:$0xff] %v1255
    %1320 = vst [vmem:[%s3 + $0x150] sm:$0xff] %v1256
    %1321 = vst [vmem:[%s3 + $0x158] sm:$0xff] %v1257
    %1322 = vst [vmem:[%s3 + $0x160] sm:$0xff] %v1258
    %1323 = vst [vmem:[%s3 + $0x168] sm:$0xff] %v1259
    %1324 = vst [vmem:[%s3 + $0x170] sm:$0xff] %v1260
    %1325 = vst [vmem:[%s3 + $0x178] sm:$0xff] %v1261
    %1326 = vst [vmem:[%s3 + $0x180] sm:$0xff] %v1262
    %1327 = vst [vmem:[%s3 + $0x188] sm:$0xff] %v1263
    %1328 = vst [vmem:[%s3 + $0x190] sm:$0xff] %v1264
    %1329 = vst [vmem:[%s3 + $0x198] sm:$0xff] %v1265
    %1330 = vst [vmem:[%s3 + $0x1a0] sm:$0xff] %v1266
    %1331 = vst [vmem:[%s3 + $0x1a8] sm:$0xff] %v1267
    %1332 = vst [vmem:[%s3 + $0x1b0] sm:$0xff] %v1268
    %1333 = vst [vmem:[%s3 + $0x1b8] sm:$0xff] %v1269
    %1334 = vst [vmem:[%s3 + $0x1c0] sm:$0xff] %v1270
    %1335 = vst [vmem:[%s3 + $0x1c8] sm:$0xff] %v1271
    %1336 = vst [vmem:[%s3 + $0x1d0] sm:$0xff] %v1272
    %1337 = vst [vmem:[%s3 + $0x1d8] sm:$0xff] %v1273
    %1338 = vst [vmem:[%s3 + $0x1e0] sm:$0xff] %v1274
    %1339 = vst [vmem:[%s3 + $0x1e8] sm:$0xff] %v1275
    %1340 = vst [vmem:[%s3 + $0x1f0] sm:$0xff] %v1276
    %1341 = vst [vmem:[%s3 + $0x1f8] sm:$0xff] %v1277
  $region21: #{_lambda_.1} parent=0 // pred_fallthru
    _
  // Predicated region
  $region22: #{_lambda_.1} parent=0 // pred_check
    _
  $region23: #{_lambda_.1} parent=0 // pred_check_branch
    %1343 = sbr.rel (0) target = $region25
  $region24: #{_lambda_.1} parent=0 // pred_region
    _
  $region25: #{_lambda_.1} parent=0 // pred_fallthru
    _
  // Predicated region
  $region26: #{_lambda_.1} parent=0 // pred_check
    _
  $region27: #{_lambda_.1} parent=0 // pred_check_branch
    %1345 = sbr.rel (0) target = $region29
  $region28: #{_lambda_.1} parent=0 // pred_region
    _
  $region29: #{_lambda_.1} parent=0 // pred_fallthru
    _

</llo_original>
